<compile_context>
chip_gen: v5e
topology: v5e:2x2
jax: 0.10.0
libtpu: 0.0.40
codegen_flags: <defaults>
</compile_context>

<pallas_src>
import functools

import jax
import jax.numpy as jnp
from jax.experimental import pallas as pl
from jax.experimental.pallas import tpu as pltpu

LN_EPS = 1e-5  # PyTorch nn.LayerNorm default eps


# ---------------------------------------------------------------------------
# Hardware-aware sizing helpers.
# ---------------------------------------------------------------------------
def _device_kind():
  try:
    return jax.devices()[0].device_kind.lower()
  except Exception:
    return ""


def _num_tensorcores():
  # v7x has 2 TensorCores per chip; v5e/v6e have 1.
  return 2 if "v7" in _device_kind() else 1


def _vmem_limit_bytes():
  # v7x: 64 MiB per TensorCore; v5e/v6e: 128 MiB.
  per_core = (64 if "v7" in _device_kind() else 128) * 1024 * 1024
  try:
    per_core = min(per_core, int(pltpu.get_tpu_info().vmem_capacity_bytes))
  except Exception:
    pass
  return max(32 * 1024 * 1024, min(int(per_core * 0.7), 90 * 1024 * 1024))


def _round_up(x, m):
  return -(-x // m) * m


def _weight_param_elems(in_dim, feat, hid, out_dim, num_blocks):
  w_elems = in_dim * feat + num_blocks * 2 * feat * hid + feat * out_dim
  v_elems = feat + num_blocks * (3 * feat + hid) + out_dim
  return w_elems, v_elems


def _choose_block_b(batch, in_dim, feat, hid, out_dim, num_blocks,
                    vmem_limit, num_cores):
  """Largest batch tile (multiple of 16, or the full batch) fitting the VMEM
  budget. Only a 2-TensorCore chip (v7x) forces >= 2 'parallel' grid steps;
  single-TC chips (v5e/v6e) never split (weights streamed exactly once)."""
  w_elems, v_elems = _weight_param_elems(in_dim, feat, hid, out_dim, num_blocks)
  weight_bytes = 2 * (w_elems * 2 + v_elems * 4)          # double-buffered worst case
  # Per-row VMEM: bf16 x tile + f32 out tile (double-buffered) + live f32
  # intermediates (h / residual / LayerNorm / 4F hidden activation).
  per_row = in_dim * 2 * 2 + out_dim * 4 * 2 + (hid + 6 * feat) * 4
  budget = max(0, int(vmem_limit * 0.6) - weight_bytes)
  cap = min(max(16, budget // max(per_row, 1)), 1024)
  if num_cores >= 2 and batch >= 32:
    # Keep at least two batch steps so both TensorCores get work.
    cap = min(cap, _round_up(_round_up(batch, 2) // 2, 16))
  if cap >= batch:
    return batch                       # single tile; full-dim block is always legal
  return max(16, (cap // 16) * 16)     # sublane-friendly (bf16 packs 16 rows/vreg)


# ---------------------------------------------------------------------------
# Fused kernel: fc -> [LayerNorm -> fc1 -> ReLU -> fc2 -> +res]*N -> ReLU -> out_fc
# Grid: (batch tiles,) ["parallel"]. All weights VMEM-resident (constant index maps).
# ---------------------------------------------------------------------------
def _make_fused_kernel(num_blocks, use_layer_norm):
  def kernel(*refs):
    it = iter(refs)
    x_ref, fc_w, fc_b = next(it), next(it), next(it)
    blocks = [tuple(next(it) for _ in range(6)) for _ in range(num_blocks)]
    out_w, out_b, o_ref = next(it), next(it), next(it)

    # fc: bf16 MXU operands, f32 accumulation.
    h = jnp.dot(x_ref[...], fc_w[...], preferred_element_type=jnp.float32)
    h = h + fc_b[...]

    for gamma, beta, w1, b1, w2, b2 in blocks:
      residual = h
      if use_layer_norm:
        mean = jnp.mean(h, axis=-1, keepdims=True)
        centered = h - mean
        var = jnp.mean(centered * centered, axis=-1, keepdims=True)  # biased (PyTorch)
        hn = centered * jax.lax.rsqrt(var + LN_EPS) * gamma[...] + beta[...]
      else:
        hn = h
      a = jnp.dot(hn.astype(w1.dtype), w1[...],
                  preferred_element_type=jnp.float32) + b1[...]
      a = jnp.maximum(a, 0.0)
      y = jnp.dot(a.astype(w2.dtype), w2[...],
                  preferred_element_type=jnp.float32) + b2[...]
      # TODO(synk): the per-block `residual` nn.Linear is structurally dead for this
      # module (fc2 output shape always equals the input shape), so it is never applied.
      h = residual + y

    h = jnp.maximum(h, 0.0)  # final activation
    out = jnp.dot(h.astype(out_w.dtype), out_w[...],
                  preferred_element_type=jnp.float32) + out_b[...]
    o_ref[...] = out.astype(o_ref.dtype)

  return kernel


def mlp_resnet_forward(x, params, *, use_layer_norm=True, block_b=None):
  """x: (B, 256) f32. Weights stored pre-transposed (in, out) in bf16, biases /
  LayerNorm params as (1, out) f32. Returns (B, out_dim) f32."""
  # TODO(synk): dropout_rate=None -> self.dropout is None in PyTorch, so no dropout op.
  B, in_dim = x.shape
  feat = params["fc"]["w"].shape[1]
  num_blocks = len(params["blocks"])
  hid = params["blocks"][0]["w1"].shape[1] if num_blocks else 4 * feat
  out_dim = params["out_fc"]["w"].shape[1]

  num_cores = _num_tensorcores()
  vmem_limit = _vmem_limit_bytes()
  if block_b is None:
    block_b = _choose_block_b(B, in_dim, feat, hid, out_dim, num_blocks,
                              vmem_limit, num_cores)

  # bf16 at the input boundary (MXU consumes bf16 anyway) -> half the x DMA bytes.
  xb = x.astype(jnp.bfloat16)
  b_pad = _round_up(B, block_b)
  if b_pad != B:
    xb = jnp.pad(xb, ((0, b_pad - B), (0, 0)))
  grid = (b_pad // block_b,)

  def batch_spec(shape):
    return pl.BlockSpec(shape, lambda i: (i, 0))

  def const_spec(shape):
    return pl.BlockSpec(shape, lambda i: (0, 0))

  in_specs = [batch_spec((block_b, in_dim)),
              const_spec((in_dim, feat)), const_spec((1, feat))]
  flat_inputs = [xb, params["fc"]["w"], params["fc"]["b"]]
  for blk in params["blocks"]:
    in_specs += [const_spec((1, feat)), const_spec((1, feat)),
                 const_spec((feat, hid)), const_spec((1, hid)),
                 const_spec((hid, feat)), const_spec((1, feat))]
    flat_inputs += [blk["ln_gamma"], blk["ln_beta"],
                    blk["w1"], blk["b1"], blk["w2"], blk["b2"]]
  in_specs += [const_spec((feat, out_dim)), const_spec((1, out_dim))]
  flat_inputs += [params["out_fc"]["w"], params["out_fc"]["b"]]

  w_elems, v_elems = _weight_param_elems(in_dim, feat, hid, out_dim, num_blocks)
  weight_bytes = w_elems * 2 + v_elems * 4
  cost = pl.CostEstimate(
      flops=2 * b_pad * (in_dim * feat + num_blocks * 2 * feat * hid
                         + feat * out_dim),
      transcendentals=b_pad * num_blocks,  # one rsqrt per row per LayerNorm
      bytes_accessed=(b_pad * in_dim * 2 + b_pad * out_dim * 4
                      + min(grid[0], num_cores) * weight_bytes))

  out = pl.pallas_call(
      _make_fused_kernel(num_blocks, use_layer_norm),
      out_shape=jax.ShapeDtypeStruct((b_pad, out_dim), jnp.float32),
      grid_spec=pltpu.PrefetchScalarGridSpec(
          num_scalar_prefetch=0,
          grid=grid,
          in_specs=in_specs,
          out_specs=pl.BlockSpec((block_b, out_dim), lambda i: (i, 0)),
      ),
      compiler_params=pltpu.CompilerParams(
          dimension_semantics=("parallel",),
          vmem_limit_bytes=vmem_limit),
      cost_estimate=cost,
  )(*flat_inputs)
  return out[:B]


# ---------------------------------------------------------------------------
# Parameters and pure-jnp reference.
# ---------------------------------------------------------------------------
def init_params(key, input_dim, hidden_dim, out_dim, num_blocks):
  def linear_init(k, fan_in, fan_out):
    kw, kb = jax.random.split(k)
    bound = 1.0 / jnp.sqrt(fan_in)
    # PyTorch nn.Linear stores W as (out, in); we store the transpose (in, out) in
    # bf16 (MXU-native operand dtype, halves weight HBM/VMEM footprint).
    w = jax.random.uniform(kw, (fan_in, fan_out), jnp.float32, -bound, bound)
    b = jax.random.uniform(kb, (1, fan_out), jnp.float32, -bound, bound)
    return w.astype(jnp.bfloat16), b

  keys = jax.random.split(key, num_blocks + 2)
  params = {"fc": {}, "blocks": [], "out_fc": {}}
  params["fc"]["w"], params["fc"]["b"] = linear_init(keys[0], input_dim, hidden_dim)
  for i in range(num_blocks):
    kb1, kb2, kg = jax.random.split(keys[1 + i], 3)
    w1, b1 = linear_init(kb1, hidden_dim, 4 * hidden_dim)
    w2, b2 = linear_init(kb2, 4 * hidden_dim, hidden_dim)
    kgg, kgb = jax.random.split(kg)
    gamma = jax.random.uniform(kgg, (1, hidden_dim), jnp.float32, 0.5, 1.5)
    beta = jax.random.uniform(kgb, (1, hidden_dim), jnp.float32, -0.1, 0.1)
    # TODO(synk): the per-block `residual` nn.Linear params are not created — the layer
    # is never applied for this module (shapes always match in forward).
    params["blocks"].append(
        dict(w1=w1, b1=b1, w2=w2, b2=b2, ln_gamma=gamma, ln_beta=beta))
  params["out_fc"]["w"], params["out_fc"]["b"] = linear_init(
      keys[-1], hidden_dim, out_dim)
  return params


def reference_forward(x, params, *, use_layer_norm=True):
  """Pure-jnp reference mimicking the kernel's bf16-operand / f32-accum numerics."""
  hi = jax.lax.Precision.HIGHEST

  def lin(v, w_bf16, b, relu_in=False):
    if relu_in:
      v = jnp.maximum(v, 0.0)
    vb = v.astype(jnp.bfloat16).astype(jnp.float32)
    return jnp.dot(vb, w_bf16.astype(jnp.float32), precision=hi) + b

  h = lin(x.astype(jnp.float32), params["fc"]["w"], params["fc"]["b"])
  for blk in params["blocks"]:
    res = h
    xn = h
    if use_layer_norm:
      mean = jnp.mean(h, axis=-1, keepdims=True)
      var = jnp.mean((h - mean) ** 2, axis=-1, keepdims=True)
      xn = (h - mean) / jnp.sqrt(var + LN_EPS) * blk["ln_gamma"] + blk["ln_beta"]
    a = jnp.maximum(lin(xn, blk["w1"], blk["b1"]), 0.0)
    y = lin(a, blk["w2"], blk["b2"])
    h = res + y
  return lin(h, params["out_fc"]["w"], params["out_fc"]["b"], relu_in=True)


if __name__ == "__main__":
  key = jax.random.PRNGKey(0)
  # Module hard-codes fc = nn.Linear(256, hidden_dim); keep other dims small but
  # MXU/lane-friendly.
  B, IN, HID, OUT, NUM_BLOCKS = 16, 256, 128, 128, 2

  kx, kp = jax.random.split(key)
  x = jax.random.normal(kx, (B, IN), jnp.float32)
  params = init_params(kp, IN, HID, OUT, NUM_BLOCKS)

  fwd = jax.jit(functools.partial(mlp_resnet_forward, use_layer_norm=True))
  out = jax.block_until_ready(fwd(x, params))

  ref = reference_forward(x, params, use_layer_norm=True)
  assert out.shape == (B, OUT)
  assert jnp.allclose(out, ref, atol=2e-2, rtol=2e-2), (
      "mismatch vs reference, max abs err = "
      + str(float(jnp.max(jnp.abs(out - ref)))))

  print("KERNEL_OK")
</pallas_src>

<mosaic_0001>
module attributes {stable_mosaic.version = 11 : i64} {
  func.func @kernel(%arg0: i32, %arg1: memref<16x256xbf16, #tpu.memory_space<vmem>>, %arg2: memref<256x128xbf16, #tpu.memory_space<vmem>>, %arg3: memref<1x128xf32, #tpu.memory_space<vmem>>, %arg4: memref<1x128xf32, #tpu.memory_space<vmem>>, %arg5: memref<1x128xf32, #tpu.memory_space<vmem>>, %arg6: memref<128x512xbf16, #tpu.memory_space<vmem>>, %arg7: memref<1x512xf32, #tpu.memory_space<vmem>>, %arg8: memref<512x128xbf16, #tpu.memory_space<vmem>>, %arg9: memref<1x128xf32, #tpu.memory_space<vmem>>, %arg10: memref<1x128xf32, #tpu.memory_space<vmem>>, %arg11: memref<1x128xf32, #tpu.memory_space<vmem>>, %arg12: memref<128x512xbf16, #tpu.memory_space<vmem>>, %arg13: memref<1x512xf32, #tpu.memory_space<vmem>>, %arg14: memref<512x128xbf16, #tpu.memory_space<vmem>>, %arg15: memref<1x128xf32, #tpu.memory_space<vmem>>, %arg16: memref<128x128xbf16, #tpu.memory_space<vmem>>, %arg17: memref<1x128xf32, #tpu.memory_space<vmem>>, %arg18: memref<16x128xf32, #tpu.memory_space<vmem>>) attributes {dimension_semantics = [#tpu.dimension_semantics<parallel>], iteration_bounds = array<i64: 1>, scalar_prefetch = 0 : i64, scratch_operands = 0 : i64, tpu.core_type = #tpu.core_type<tc>, window_params = [{transform_indices = @transform_0, window_bounds = array<i64: 16, 256>}, {pipeline_mode = #tpu.pipeline_mode<synchronous>, transform_indices = @transform_1, window_bounds = array<i64: 256, 128>}, {pipeline_mode = #tpu.pipeline_mode<synchronous>, transform_indices = @transform_2, window_bounds = array<i64: 1, 128>}, {pipeline_mode = #tpu.pipeline_mode<synchronous>, transform_indices = @transform_3, window_bounds = array<i64: 1, 128>}, {pipeline_mode = #tpu.pipeline_mode<synchronous>, transform_indices = @transform_4, window_bounds = array<i64: 1, 128>}, {pipeline_mode = #tpu.pipeline_mode<synchronous>, transform_indices = @transform_5, window_bounds = array<i64: 128, 512>}, {pipeline_mode = #tpu.pipeline_mode<synchronous>, transform_indices = @transform_6, window_bounds = array<i64: 1, 512>}, {pipeline_mode = #tpu.pipeline_mode<synchronous>, transform_indices = @transform_7, window_bounds = array<i64: 512, 128>}, {pipeline_mode = #tpu.pipeline_mode<synchronous>, transform_indices = @transform_8, window_bounds = array<i64: 1, 128>}, {pipeline_mode = #tpu.pipeline_mode<synchronous>, transform_indices = @transform_9, window_bounds = array<i64: 1, 128>}, {pipeline_mode = #tpu.pipeline_mode<synchronous>, transform_indices = @transform_10, window_bounds = array<i64: 1, 128>}, {pipeline_mode = #tpu.pipeline_mode<synchronous>, transform_indices = @transform_11, window_bounds = array<i64: 128, 512>}, {pipeline_mode = #tpu.pipeline_mode<synchronous>, transform_indices = @transform_12, window_bounds = array<i64: 1, 512>}, {pipeline_mode = #tpu.pipeline_mode<synchronous>, transform_indices = @transform_13, window_bounds = array<i64: 512, 128>}, {pipeline_mode = #tpu.pipeline_mode<synchronous>, transform_indices = @transform_14, window_bounds = array<i64: 1, 128>}, {pipeline_mode = #tpu.pipeline_mode<synchronous>, transform_indices = @transform_15, window_bounds = array<i64: 128, 128>}, {pipeline_mode = #tpu.pipeline_mode<synchronous>, transform_indices = @transform_16, window_bounds = array<i64: 1, 128>}, {transform_indices = @transform_17, window_bounds = array<i64: 16, 128>}]} {
    %c0 = arith.constant 0 : index
    %c0_0 = arith.constant 0 : index
    %0 = vector.load %arg1[%c0, %c0_0] : memref<16x256xbf16, #tpu.memory_space<vmem>>, vector<16x256xbf16>
    %c0_1 = arith.constant 0 : index
    %c0_2 = arith.constant 0 : index
    %1 = vector.load %arg2[%c0_1, %c0_2] : memref<256x128xbf16, #tpu.memory_space<vmem>>, vector<256x128xbf16>
    %cst = arith.constant dense<0.000000e+00> : vector<16x128xf32>
    %2 = tpu.matmul %0, %1, %cst {dimension_numbers = #tpu.dot_dimension_numbers<[1], [0], [0], [1], [0, 0, 1, 1], [], []>} : vector<16x256xbf16>, vector<256x128xbf16>, vector<16x128xf32> -> vector<16x128xf32>
    %c0_3 = arith.constant 0 : index
    %c0_4 = arith.constant 0 : index
    %3 = vector.load %arg3[%c0_3, %c0_4] : memref<1x128xf32, #tpu.memory_space<vmem>>, vector<1x128xf32>
    %4 = vector.broadcast %3 : vector<1x128xf32> to vector<16x128xf32>
    %5 = arith.addf %2, %4 : vector<16x128xf32>
    %cst_5 = arith.constant dense<0.000000e+00> : vector<16xf32>
    %6 = vector.multi_reduction <add>, %5, %cst_5 [1] : vector<16x128xf32> to vector<16xf32>
    %7 = vector.shape_cast %6 : vector<16xf32> to vector<16x1xf32>
    %cst_6 = arith.constant 1.280000e+02 : f32
    %8 = vector.broadcast %cst_6 : f32 to vector<16x1xf32>
    %9 = arith.divf %7, %8 : vector<16x1xf32>
    %10 = vector.broadcast %9 : vector<16x1xf32> to vector<16x128xf32>
    %11 = arith.subf %5, %10 : vector<16x128xf32>
    %12 = arith.mulf %11, %11 : vector<16x128xf32>
    %cst_7 = arith.constant dense<0.000000e+00> : vector<16xf32>
    %13 = vector.multi_reduction <add>, %12, %cst_7 [1] : vector<16x128xf32> to vector<16xf32>
    %14 = vector.shape_cast %13 : vector<16xf32> to vector<16x1xf32>
    %cst_8 = arith.constant 1.280000e+02 : f32
    %15 = vector.broadcast %cst_8 : f32 to vector<16x1xf32>
    %16 = arith.divf %14, %15 : vector<16x1xf32>
    %cst_9 = arith.constant 9.99999974E-6 : f32
    %17 = vector.broadcast %cst_9 : f32 to vector<16x1xf32>
    %18 = arith.addf %16, %17 : vector<16x1xf32>
    %19 = math.rsqrt %18 : vector<16x1xf32>
    %20 = vector.broadcast %19 : vector<16x1xf32> to vector<16x128xf32>
    %21 = arith.mulf %11, %20 : vector<16x128xf32>
    %c0_10 = arith.constant 0 : index
    %c0_11 = arith.constant 0 : index
    %22 = vector.load %arg4[%c0_10, %c0_11] : memref<1x128xf32, #tpu.memory_space<vmem>>, vector<1x128xf32>
    %23 = vector.broadcast %22 : vector<1x128xf32> to vector<16x128xf32>
    %24 = arith.mulf %21, %23 : vector<16x128xf32>
    %c0_12 = arith.constant 0 : index
    %c0_13 = arith.constant 0 : index
    %25 = vector.load %arg5[%c0_12, %c0_13] : memref<1x128xf32, #tpu.memory_space<vmem>>, vector<1x128xf32>
    %26 = vector.broadcast %25 : vector<1x128xf32> to vector<16x128xf32>
    %27 = arith.addf %24, %26 : vector<16x128xf32>
    %28 = arith.truncf %27 : vector<16x128xf32> to vector<16x128xbf16>
    %c0_14 = arith.constant 0 : index
    %c0_15 = arith.constant 0 : index
    %29 = vector.load %arg6[%c0_14, %c0_15] : memref<128x512xbf16, #tpu.memory_space<vmem>>, vector<128x512xbf16>
    %cst_16 = arith.constant dense<0.000000e+00> : vector<16x512xf32>
    %30 = tpu.matmul %28, %29, %cst_16 {dimension_numbers = #tpu.dot_dimension_numbers<[1], [0], [0], [1], [0, 0, 1, 1], [], []>} : vector<16x128xbf16>, vector<128x512xbf16>, vector<16x512xf32> -> vector<16x512xf32>
    %c0_17 = arith.constant 0 : index
    %c0_18 = arith.constant 0 : index
    %31 = vector.load %arg7[%c0_17, %c0_18] : memref<1x512xf32, #tpu.memory_space<vmem>>, vector<1x512xf32>
    %32 = vector.broadcast %31 : vector<1x512xf32> to vector<16x512xf32>
    %33 = arith.addf %30, %32 : vector<16x512xf32>
    %cst_19 = arith.constant 0.000000e+00 : f32
    %34 = vector.broadcast %cst_19 : f32 to vector<16x512xf32>
    %35 = arith.maximumf %33, %34 : vector<16x512xf32>
    %36 = arith.truncf %35 : vector<16x512xf32> to vector<16x512xbf16>
    %c0_20 = arith.constant 0 : index
    %c0_21 = arith.constant 0 : index
    %37 = vector.load %arg8[%c0_20, %c0_21] : memref<512x128xbf16, #tpu.memory_space<vmem>>, vector<512x128xbf16>
    %cst_22 = arith.constant dense<0.000000e+00> : vector<16x128xf32>
    %38 = tpu.matmul %36, %37, %cst_22 {dimension_numbers = #tpu.dot_dimension_numbers<[1], [0], [0], [1], [0, 0, 1, 1], [], []>} : vector<16x512xbf16>, vector<512x128xbf16>, vector<16x128xf32> -> vector<16x128xf32>
    %c0_23 = arith.constant 0 : index
    %c0_24 = arith.constant 0 : index
    %39 = vector.load %arg9[%c0_23, %c0_24] : memref<1x128xf32, #tpu.memory_space<vmem>>, vector<1x128xf32>
    %40 = vector.broadcast %39 : vector<1x128xf32> to vector<16x128xf32>
    %41 = arith.addf %38, %40 : vector<16x128xf32>
    %42 = arith.addf %5, %41 : vector<16x128xf32>
    %cst_25 = arith.constant dense<0.000000e+00> : vector<16xf32>
    %43 = vector.multi_reduction <add>, %42, %cst_25 [1] : vector<16x128xf32> to vector<16xf32>
    %44 = vector.shape_cast %43 : vector<16xf32> to vector<16x1xf32>
    %cst_26 = arith.constant 1.280000e+02 : f32
    %45 = vector.broadcast %cst_26 : f32 to vector<16x1xf32>
    %46 = arith.divf %44, %45 : vector<16x1xf32>
    %47 = vector.broadcast %46 : vector<16x1xf32> to vector<16x128xf32>
    %48 = arith.subf %42, %47 : vector<16x128xf32>
    %49 = arith.mulf %48, %48 : vector<16x128xf32>
    %cst_27 = arith.constant dense<0.000000e+00> : vector<16xf32>
    %50 = vector.multi_reduction <add>, %49, %cst_27 [1] : vector<16x128xf32> to vector<16xf32>
    %51 = vector.shape_cast %50 : vector<16xf32> to vector<16x1xf32>
    %cst_28 = arith.constant 1.280000e+02 : f32
    %52 = vector.broadcast %cst_28 : f32 to vector<16x1xf32>
    %53 = arith.divf %51, %52 : vector<16x1xf32>
    %cst_29 = arith.constant 9.99999974E-6 : f32
    %54 = vector.broadcast %cst_29 : f32 to vector<16x1xf32>
    %55 = arith.addf %53, %54 : vector<16x1xf32>
    %56 = math.rsqrt %55 : vector<16x1xf32>
    %57 = vector.broadcast %56 : vector<16x1xf32> to vector<16x128xf32>
    %58 = arith.mulf %48, %57 : vector<16x128xf32>
    %c0_30 = arith.constant 0 : index
    %c0_31 = arith.constant 0 : index
    %59 = vector.load %arg10[%c0_30, %c0_31] : memref<1x128xf32, #tpu.memory_space<vmem>>, vector<1x128xf32>
    %60 = vector.broadcast %59 : vector<1x128xf32> to vector<16x128xf32>
    %61 = arith.mulf %58, %60 : vector<16x128xf32>
    %c0_32 = arith.constant 0 : index
    %c0_33 = arith.constant 0 : index
    %62 = vector.load %arg11[%c0_32, %c0_33] : memref<1x128xf32, #tpu.memory_space<vmem>>, vector<1x128xf32>
    %63 = vector.broadcast %62 : vector<1x128xf32> to vector<16x128xf32>
    %64 = arith.addf %61, %63 : vector<16x128xf32>
    %65 = arith.truncf %64 : vector<16x128xf32> to vector<16x128xbf16>
    %c0_34 = arith.constant 0 : index
    %c0_35 = arith.constant 0 : index
    %66 = vector.load %arg12[%c0_34, %c0_35] : memref<128x512xbf16, #tpu.memory_space<vmem>>, vector<128x512xbf16>
    %cst_36 = arith.constant dense<0.000000e+00> : vector<16x512xf32>
    %67 = tpu.matmul %65, %66, %cst_36 {dimension_numbers = #tpu.dot_dimension_numbers<[1], [0], [0], [1], [0, 0, 1, 1], [], []>} : vector<16x128xbf16>, vector<128x512xbf16>, vector<16x512xf32> -> vector<16x512xf32>
    %c0_37 = arith.constant 0 : index
    %c0_38 = arith.constant 0 : index
    %68 = vector.load %arg13[%c0_37, %c0_38] : memref<1x512xf32, #tpu.memory_space<vmem>>, vector<1x512xf32>
    %69 = vector.broadcast %68 : vector<1x512xf32> to vector<16x512xf32>
    %70 = arith.addf %67, %69 : vector<16x512xf32>
    %cst_39 = arith.constant 0.000000e+00 : f32
    %71 = vector.broadcast %cst_39 : f32 to vector<16x512xf32>
    %72 = arith.maximumf %70, %71 : vector<16x512xf32>
    %73 = arith.truncf %72 : vector<16x512xf32> to vector<16x512xbf16>
    %c0_40 = arith.constant 0 : index
    %c0_41 = arith.constant 0 : index
    %74 = vector.load %arg14[%c0_40, %c0_41] : memref<512x128xbf16, #tpu.memory_space<vmem>>, vector<512x128xbf16>
    %cst_42 = arith.constant dense<0.000000e+00> : vector<16x128xf32>
    %75 = tpu.matmul %73, %74, %cst_42 {dimension_numbers = #tpu.dot_dimension_numbers<[1], [0], [0], [1], [0, 0, 1, 1], [], []>} : vector<16x512xbf16>, vector<512x128xbf16>, vector<16x128xf32> -> vector<16x128xf32>
    %c0_43 = arith.constant 0 : index
    %c0_44 = arith.constant 0 : index
    %76 = vector.load %arg15[%c0_43, %c0_44] : memref<1x128xf32, #tpu.memory_space<vmem>>, vector<1x128xf32>
    %77 = vector.broadcast %76 : vector<1x128xf32> to vector<16x128xf32>
    %78 = arith.addf %75, %77 : vector<16x128xf32>
    %79 = arith.addf %42, %78 : vector<16x128xf32>
    %cst_45 = arith.constant 0.000000e+00 : f32
    %80 = vector.broadcast %cst_45 : f32 to vector<16x128xf32>
    %81 = arith.maximumf %79, %80 : vector<16x128xf32>
    %82 = arith.truncf %81 : vector<16x128xf32> to vector<16x128xbf16>
    %c0_46 = arith.constant 0 : index
    %c0_47 = arith.constant 0 : index
    %83 = vector.load %arg16[%c0_46, %c0_47] : memref<128x128xbf16, #tpu.memory_space<vmem>>, vector<128x128xbf16>
    %cst_48 = arith.constant dense<0.000000e+00> : vector<16x128xf32>
    %84 = tpu.matmul %82, %83, %cst_48 {dimension_numbers = #tpu.dot_dimension_numbers<[1], [0], [0], [1], [0, 0, 1, 1], [], []>} : vector<16x128xbf16>, vector<128x128xbf16>, vector<16x128xf32> -> vector<16x128xf32>
    %c0_49 = arith.constant 0 : index
    %c0_50 = arith.constant 0 : index
    %85 = vector.load %arg17[%c0_49, %c0_50] : memref<1x128xf32, #tpu.memory_space<vmem>>, vector<1x128xf32>
    %86 = vector.broadcast %85 : vector<1x128xf32> to vector<16x128xf32>
    %87 = arith.addf %84, %86 : vector<16x128xf32>
    %c0_51 = arith.constant 0 : index
    %c0_52 = arith.constant 0 : index
    %88 = vector.load %arg18[%c0_51, %c0_52] : memref<16x128xf32, #tpu.memory_space<vmem>>, vector<16x128xf32>
    tpu.vector_store %arg18[%c0_51, %c0_52], %87 {strides = array<i32>} : memref<16x128xf32, #tpu.memory_space<vmem>>, vector<16x128xf32>,
    return
  }
  func.func @transform_0(%arg0: i32) -> (i32, i32) {
    %c0_i32 = arith.constant 0 : i32
    %c0_i32_0 = arith.constant 0 : i32
    return %arg0, %c0_i32 : i32, i32
  }
  func.func @transform_1(%arg0: i32) -> (i32, i32) {
    %c0_i32 = arith.constant 0 : i32
    %c0_i32_0 = arith.constant 0 : i32
    %c0_i32_1 = arith.constant 0 : i32
    return %c0_i32, %c0_i32_0 : i32, i32
  }
  func.func @transform_2(%arg0: i32) -> (i32, i32) {
    %c0_i32 = arith.constant 0 : i32
    %c0_i32_0 = arith.constant 0 : i32
    %c0_i32_1 = arith.constant 0 : i32
    return %c0_i32, %c0_i32_0 : i32, i32
  }
  func.func @transform_3(%arg0: i32) -> (i32, i32) {
    %c0_i32 = arith.constant 0 : i32
    %c0_i32_0 = arith.constant 0 : i32
    %c0_i32_1 = arith.constant 0 : i32
    return %c0_i32, %c0_i32_0 : i32, i32
  }
  func.func @transform_4(%arg0: i32) -> (i32, i32) {
    %c0_i32 = arith.constant 0 : i32
    %c0_i32_0 = arith.constant 0 : i32
    %c0_i32_1 = arith.constant 0 : i32
    return %c0_i32, %c0_i32_0 : i32, i32
  }
  func.func @transform_5(%arg0: i32) -> (i32, i32) {
    %c0_i32 = arith.constant 0 : i32
    %c0_i32_0 = arith.constant 0 : i32
    %c0_i32_1 = arith.constant 0 : i32
    return %c0_i32, %c0_i32_0 : i32, i32
  }
  func.func @transform_6(%arg0: i32) -> (i32, i32) {
    %c0_i32 = arith.constant 0 : i32
    %c0_i32_0 = arith.constant 0 : i32
    %c0_i32_1 = arith.constant 0 : i32
    return %c0_i32, %c0_i32_0 : i32, i32
  }
  func.func @transform_7(%arg0: i32) -> (i32, i32) {
    %c0_i32 = arith.constant 0 : i32
    %c0_i32_0 = arith.constant 0 : i32
    %c0_i32_1 = arith.constant 0 : i32
    return %c0_i32, %c0_i32_0 : i32, i32
  }
  func.func @transform_8(%arg0: i32) -> (i32, i32) {
    %c0_i32 = arith.constant 0 : i32
    %c0_i32_0 = arith.constant 0 : i32
    %c0_i32_1 = arith.constant 0 : i32
    return %c0_i32, %c0_i32_0 : i32, i32
  }
  func.func @transform_9(%arg0: i32) -> (i32, i32) {
    %c0_i32 = arith.constant 0 : i32
    %c0_i32_0 = arith.constant 0 : i32
    %c0_i32_1 = arith.constant 0 : i32
    return %c0_i32, %c0_i32_0 : i32, i32
  }
  func.func @transform_10(%arg0: i32) -> (i32, i32) {
    %c0_i32 = arith.constant 0 : i32
    %c0_i32_0 = arith.constant 0 : i32
    %c0_i32_1 = arith.constant 0 : i32
    return %c0_i32, %c0_i32_0 : i32, i32
  }
  func.func @transform_11(%arg0: i32) -> (i32, i32) {
    %c0_i32 = arith.constant 0 : i32
    %c0_i32_0 = arith.constant 0 : i32
    %c0_i32_1 = arith.constant 0 : i32
    return %c0_i32, %c0_i32_0 : i32, i32
  }
  func.func @transform_12(%arg0: i32) -> (i32, i32) {
    %c0_i32 = arith.constant 0 : i32
    %c0_i32_0 = arith.constant 0 : i32
    %c0_i32_1 = arith.constant 0 : i32
    return %c0_i32, %c0_i32_0 : i32, i32
  }
  func.func @transform_13(%arg0: i32) -> (i32, i32) {
    %c0_i32 = arith.constant 0 : i32
    %c0_i32_0 = arith.constant 0 : i32
    %c0_i32_1 = arith.constant 0 : i32
    return %c0_i32, %c0_i32_0 : i32, i32
  }
  func.func @transform_14(%arg0: i32) -> (i32, i32) {
    %c0_i32 = arith.constant 0 : i32
    %c0_i32_0 = arith.constant 0 : i32
    %c0_i32_1 = arith.constant 0 : i32
    return %c0_i32, %c0_i32_0 : i32, i32
  }
  func.func @transform_15(%arg0: i32) -> (i32, i32) {
    %c0_i32 = arith.constant 0 : i32
    %c0_i32_0 = arith.constant 0 : i32
    %c0_i32_1 = arith.constant 0 : i32
    return %c0_i32, %c0_i32_0 : i32, i32
  }
  func.func @transform_16(%arg0: i32) -> (i32, i32) {
    %c0_i32 = arith.constant 0 : i32
    %c0_i32_0 = arith.constant 0 : i32
    %c0_i32_1 = arith.constant 0 : i32
    return %c0_i32, %c0_i32_0 : i32, i32
  }
  func.func @transform_17(%arg0: i32) -> (i32, i32) {
    %c0_i32 = arith.constant 0 : i32
    %c0_i32_0 = arith.constant 0 : i32
    return %arg0, %c0_i32 : i32, i32
  }
}

</mosaic_0001>

<llo_original>
// kernel: mlp_resnet_forward.1
$region0: #{mlp_resnet_forward.1}
  #allocation0 [shape = 'u32[]', space=smem, size = 0x4, offset = 0x4, fixed_abs, tag = 'smem constant byte address 0x4 - core index']
  #allocation1 [shape = 'u32[72,128]{1,0:T(1,128)}', space=vmem, size = 0x9000, scoped, tag = 'internal scratch']
  %s0 = inlined_call_operand.vmem [shape: bf16[16,256], index: 0, kind: input, shape index: {}]
  %s1 = inlined_call_operand.hbm [shape: bf16[256,128], index: 1, kind: input, shape index: {}]
  %s2 = inlined_call_operand.vmem [shape: f32[1,128], index: 2, kind: input, shape index: {}]
  %s3 = inlined_call_operand.vmem [shape: f32[1,128], index: 3, kind: input, shape index: {}]
  %s4 = inlined_call_operand.vmem [shape: f32[1,128], index: 4, kind: input, shape index: {}]
  %s5 = inlined_call_operand.hbm [shape: bf16[128,512], index: 5, kind: input, shape index: {}]
  %s6 = inlined_call_operand.vmem [shape: f32[1,512], index: 6, kind: input, shape index: {}]
  %s7 = inlined_call_operand.hbm [shape: bf16[512,128], index: 7, kind: input, shape index: {}]
  %s8 = inlined_call_operand.vmem [shape: f32[1,128], index: 8, kind: input, shape index: {}]
  %s9 = inlined_call_operand.vmem [shape: f32[1,128], index: 9, kind: input, shape index: {}]
  %s10 = inlined_call_operand.vmem [shape: f32[1,128], index: 10, kind: input, shape index: {}]
  %s11 = inlined_call_operand.hbm [shape: bf16[128,512], index: 11, kind: input, shape index: {}]
  %s12 = inlined_call_operand.vmem [shape: f32[1,512], index: 12, kind: input, shape index: {}]
  %s13 = inlined_call_operand.hbm [shape: bf16[512,128], index: 13, kind: input, shape index: {}]
  %s14 = inlined_call_operand.vmem [shape: f32[1,128], index: 14, kind: input, shape index: {}]
  %s15 = inlined_call_operand.hbm [shape: bf16[128,128], index: 15, kind: input, shape index: {}]
  %s16 = inlined_call_operand.vmem [shape: f32[1,128], index: 16, kind: input, shape index: {}]
  %s17 = inlined_call_operand.hbm [shape: f32[16,128], index: 17, kind: output, shape index: {}]
  %s18 = sld [smem:[#allocation0]]
  $region102: #{mlp_resnet_forward.1} parent=0
    _
  %s20 = ssub.s32 1, %s18
  %s21 = scalar_select 0, %s20, %s18
  $region1: #{mlp_resnet_forward.1} parent=0
    #allocation2 [shape = 'u8[65536]{0}', space=vmem, size = 0x10000, scoped, tag = 'input window, operand 1, single buffered']
    #allocation3 [shape = 's32[1]{0}', space=sflag, size = 0x4, scoped, tag = 'scoped memory for mlp_resnet_forward.1']
    #allocation4 [shape = 's32[1]{0}', space=sflag, size = 0x4, scoped, tag = 'scoped memory for mlp_resnet_forward.1']
    #allocation5 [shape = 'u8[131072]{0}', space=vmem, size = 0x20000, scoped, tag = 'input window, operand 5, single buffered']
    #allocation6 [shape = 's32[1]{0}', space=sflag, size = 0x4, scoped, tag = 'scoped memory for mlp_resnet_forward.1']
    #allocation7 [shape = 'u8[131072]{0}', space=vmem, size = 0x20000, scoped, tag = 'input window, operand 7, single buffered']
    #allocation8 [shape = 'u8[131072]{0}', space=vmem, size = 0x20000, scoped, tag = 'input window, operand 11, single buffered']
    #allocation9 [shape = 's32[1]{0}', space=sflag, size = 0x4, scoped, tag = 'scoped memory for mlp_resnet_forward.1']
    #allocation10 [shape = 'u8[131072]{0}', space=vmem, size = 0x20000, scoped, tag = 'input window, operand 13, single buffered']
    #allocation11 [shape = 'u8[32768]{0}', space=vmem, size = 0x8000, scoped, tag = 'input window, operand 15, single buffered']
    #allocation12 [shape = 's32[1]{0}', space=sflag, size = 0x4, scoped, tag = 'scoped memory for mlp_resnet_forward.1']
    #allocation13 [shape = 'u8[8192]{0}', space=vmem, size = 0x2000, scoped, tag = 'output window, operand 0, single buffered']
    %22 = vsyncpa [#allocation3], 0
    %23 = vsyncpa [#allocation6], 0
    %24 = vsyncpa [#allocation9], 0
    %25 = vsyncpa [#allocation12], 0
    %26 = vsyncpa [#allocation4], 0
    // Predicated region
    $region2: #{mlp_resnet_forward.1} parent=1 // pred_check
      _
    $region3: #{mlp_resnet_forward.1} parent=1 // pred_check_branch
      %28 = sbr.rel (0) target = $region5
    $region4: #{mlp_resnet_forward.1} parent=1 // pred_region
      _
    $region5: #{mlp_resnet_forward.1} parent=1 // pred_fallthru
      _
    // Predicated region
    $region6: #{mlp_resnet_forward.1} parent=1 // pred_check
      _
    $region7: #{mlp_resnet_forward.1} parent=1 // pred_check_branch
      %30 = sbr.rel (0) target = $region9
    $region8: #{mlp_resnet_forward.1} parent=1 // pred_region
      %32 = vsyncadd [#allocation3], 0
      %s33 = sshll.u32 %s1, 4
      %s34 = int_to_ptr.hbm [resolvable:$true] %s33
      %s35 = sshll.u32 [#allocation2], 4
      %s36 = int_to_ptr.vmem [resolvable:$true] %s35
      %41 = dma.hbm_to_vmem [thread:$0]  %s34, 2048, %s36, [#allocation3], 64, 64, 4
    $region9: #{mlp_resnet_forward.1} parent=1 // pred_fallthru
      _
    // Predicated region
    $region10: #{mlp_resnet_forward.1} parent=1 // pred_check
      _
    $region11: #{mlp_resnet_forward.1} parent=1 // pred_check_branch
      %43 = sbr.rel (0) target = $region13
    $region12: #{mlp_resnet_forward.1} parent=1 // pred_region
      _
    $region13: #{mlp_resnet_forward.1} parent=1 // pred_fallthru
      _
    // Predicated region
    $region14: #{mlp_resnet_forward.1} parent=1 // pred_check
      _
    $region15: #{mlp_resnet_forward.1} parent=1 // pred_check_branch
      %45 = sbr.rel (0) target = $region17
    $region16: #{mlp_resnet_forward.1} parent=1 // pred_region
      _
    $region17: #{mlp_resnet_forward.1} parent=1 // pred_fallthru
      _
    // Predicated region
    $region18: #{mlp_resnet_forward.1} parent=1 // pred_check
      _
    $region19: #{mlp_resnet_forward.1} parent=1 // pred_check_branch
      %47 = sbr.rel (0) target = $region21
    $region20: #{mlp_resnet_forward.1} parent=1 // pred_region
      _
    $region21: #{mlp_resnet_forward.1} parent=1 // pred_fallthru
      _
    // Predicated region
    $region22: #{mlp_resnet_forward.1} parent=1 // pred_check
      _
    $region23: #{mlp_resnet_forward.1} parent=1 // pred_check_branch
      %49 = sbr.rel (0) target = $region25
    $region24: #{mlp_resnet_forward.1} parent=1 // pred_region
      %51 = vsyncadd [#allocation6], 0
      %s52 = sshll.u32 %s5, 4
      %s53 = int_to_ptr.hbm [resolvable:$true] %s52
      %s54 = sshll.u32 [#allocation5], 4
      %s55 = int_to_ptr.vmem [resolvable:$true] %s54
      %60 = dma.hbm_to_vmem [thread:$0]  %s53, 4096, %s55, [#allocation6], 256, 256, 16
    $region25: #{mlp_resnet_forward.1} parent=1 // pred_fallthru
      _
    // Predicated region
    $region26: #{mlp_resnet_forward.1} parent=1 // pred_check
      _
    $region27: #{mlp_resnet_forward.1} parent=1 // pred_check_branch
      %62 = sbr.rel (0) target = $region29
    $region28: #{mlp_resnet_forward.1} parent=1 // pred_region
      _
    $region29: #{mlp_resnet_forward.1} parent=1 // pred_fallthru
      _
    // Predicated region
    $region30: #{mlp_resnet_forward.1} parent=1 // pred_check
      _
    $region31: #{mlp_resnet_forward.1} parent=1 // pred_check_branch
      %64 = sbr.rel (0) target = $region33
    $region32: #{mlp_resnet_forward.1} parent=1 // pred_region
      %66 = vsyncadd [#allocation6], 0
      %s67 = sshll.u32 %s7, 4
      %s68 = int_to_ptr.hbm [resolvable:$true] %s67
      %s69 = sshll.u32 [#allocation7], 4
      %s70 = int_to_ptr.vmem [resolvable:$true] %s69
      %75 = dma.hbm_to_vmem [thread:$0]  %s68, 4096, %s70, [#allocation6], 64, 64, 4
    $region33: #{mlp_resnet_forward.1} parent=1 // pred_fallthru
      _
    // Predicated region
    $region34: #{mlp_resnet_forward.1} parent=1 // pred_check
      _
    $region35: #{mlp_resnet_forward.1} parent=1 // pred_check_branch
      %77 = sbr.rel (0) target = $region37
    $region36: #{mlp_resnet_forward.1} parent=1 // pred_region
      _
    $region37: #{mlp_resnet_forward.1} parent=1 // pred_fallthru
      _
    // Predicated region
    $region38: #{mlp_resnet_forward.1} parent=1 // pred_check
      _
    $region39: #{mlp_resnet_forward.1} parent=1 // pred_check_branch
      %79 = sbr.rel (0) target = $region41
    $region40: #{mlp_resnet_forward.1} parent=1 // pred_region
      _
    $region41: #{mlp_resnet_forward.1} parent=1 // pred_fallthru
      _
    // Predicated region
    $region42: #{mlp_resnet_forward.1} parent=1 // pred_check
      _
    $region43: #{mlp_resnet_forward.1} parent=1 // pred_check_branch
      %81 = sbr.rel (0) target = $region45
    $region44: #{mlp_resnet_forward.1} parent=1 // pred_region
      _
    $region45: #{mlp_resnet_forward.1} parent=1 // pred_fallthru
      _
    // Predicated region
    $region46: #{mlp_resnet_forward.1} parent=1 // pred_check
      _
    $region47: #{mlp_resnet_forward.1} parent=1 // pred_check_branch
      %83 = sbr.rel (0) target = $region49
    $region48: #{mlp_resnet_forward.1} parent=1 // pred_region
      %85 = vsyncadd [#allocation9], 0
      %s86 = sshll.u32 %s11, 4
      %s87 = int_to_ptr.hbm [resolvable:$true] %s86
      %s88 = sshll.u32 [#allocation8], 4
      %s89 = int_to_ptr.vmem [resolvable:$true] %s88
      %94 = dma.hbm_to_vmem [thread:$0]  %s87, 4096, %s89, [#allocation9], 256, 256, 16
    $region49: #{mlp_resnet_forward.1} parent=1 // pred_fallthru
      _
    // Predicated region
    $region50: #{mlp_resnet_forward.1} parent=1 // pred_check
      _
    $region51: #{mlp_resnet_forward.1} parent=1 // pred_check_branch
      %96 = sbr.rel (0) target = $region53
    $region52: #{mlp_resnet_forward.1} parent=1 // pred_region
      _
    $region53: #{mlp_resnet_forward.1} parent=1 // pred_fallthru
      _
    // Predicated region
    $region54: #{mlp_resnet_forward.1} parent=1 // pred_check
      _
    $region55: #{mlp_resnet_forward.1} parent=1 // pred_check_branch
      %98 = sbr.rel (0) target = $region57
    $region56: #{mlp_resnet_forward.1} parent=1 // pred_region
      %100 = vsyncadd [#allocation9], 0
      %s101 = sshll.u32 %s13, 4
      %s102 = int_to_ptr.hbm [resolvable:$true] %s101
      %s103 = sshll.u32 [#allocation10], 4
      %s104 = int_to_ptr.vmem [resolvable:$true] %s103
      %109 = dma.hbm_to_vmem [thread:$0]  %s102, 4096, %s104, [#allocation9], 64, 64, 4
    $region57: #{mlp_resnet_forward.1} parent=1 // pred_fallthru
      _
    // Predicated region
    $region58: #{mlp_resnet_forward.1} parent=1 // pred_check
      _
    $region59: #{mlp_resnet_forward.1} parent=1 // pred_check_branch
      %111 = sbr.rel (0) target = $region61
    $region60: #{mlp_resnet_forward.1} parent=1 // pred_region
      _
    $region61: #{mlp_resnet_forward.1} parent=1 // pred_fallthru
      _
    // Predicated region
    $region62: #{mlp_resnet_forward.1} parent=1 // pred_check
      _
    $region63: #{mlp_resnet_forward.1} parent=1 // pred_check_branch
      %113 = sbr.rel (0) target = $region65
    $region64: #{mlp_resnet_forward.1} parent=1 // pred_region
      %115 = vsyncadd [#allocation12], 0
      %s116 = sshll.u32 %s15, 4
      %s117 = int_to_ptr.hbm [resolvable:$true] %s116
      %s118 = sshll.u32 [#allocation11], 4
      %s119 = int_to_ptr.vmem [resolvable:$true] %s118
      %124 = dma.hbm_to_vmem [thread:$0]  %s117, 1024, %s119, [#allocation12], 64, 64, 4
    $region65: #{mlp_resnet_forward.1} parent=1 // pred_fallthru
      _
    // Predicated region
    $region66: #{mlp_resnet_forward.1} parent=1 // pred_check
      _
    $region67: #{mlp_resnet_forward.1} parent=1 // pred_check_branch
      %126 = sbr.rel (0) target = $region69
    $region68: #{mlp_resnet_forward.1} parent=1 // pred_region
      _
    $region69: #{mlp_resnet_forward.1} parent=1 // pred_fallthru
      _
    // Predicated region
    $region70: #{mlp_resnet_forward.1} parent=1 // pred_check
      _
    $region71: #{mlp_resnet_forward.1} parent=1 // pred_check_branch
      %128 = sbr.rel (0) target = $region73
    $region72: #{mlp_resnet_forward.1} parent=1 // pred_region
      %130 = dma.done [#allocation3], 2048
    $region73: #{mlp_resnet_forward.1} parent=1 // pred_fallthru
      _
    // Predicated region
    $region74: #{mlp_resnet_forward.1} parent=1 // pred_check
      _
    $region75: #{mlp_resnet_forward.1} parent=1 // pred_check_branch
      %132 = sbr.rel (0) target = $region77
    $region76: #{mlp_resnet_forward.1} parent=1 // pred_region
      %134 = dma.done [#allocation6], 4096
    $region77: #{mlp_resnet_forward.1} parent=1 // pred_fallthru
      _
    // Predicated region
    $region78: #{mlp_resnet_forward.1} parent=1 // pred_check
      _
    $region79: #{mlp_resnet_forward.1} parent=1 // pred_check_branch
      %136 = sbr.rel (0) target = $region81
    $region80: #{mlp_resnet_forward.1} parent=1 // pred_region
      %138 = dma.done [#allocation6], 4096
    $region81: #{mlp_resnet_forward.1} parent=1 // pred_fallthru
      _
    // Predicated region
    $region82: #{mlp_resnet_forward.1} parent=1 // pred_check
      _
    $region83: #{mlp_resnet_forward.1} parent=1 // pred_check_branch
      %140 = sbr.rel (0) target = $region85
    $region84: #{mlp_resnet_forward.1} parent=1 // pred_region
      %142 = dma.done [#allocation9], 4096
    $region85: #{mlp_resnet_forward.1} parent=1 // pred_fallthru
      _
    // Predicated region
    $region86: #{mlp_resnet_forward.1} parent=1 // pred_check
      _
    $region87: #{mlp_resnet_forward.1} parent=1 // pred_check_branch
      %144 = sbr.rel (0) target = $region89
    $region88: #{mlp_resnet_forward.1} parent=1 // pred_region
      %146 = dma.done [#allocation9], 4096
    $region89: #{mlp_resnet_forward.1} parent=1 // pred_fallthru
      _
    // Predicated region
    $region90: #{mlp_resnet_forward.1} parent=1 // pred_check
      _
    $region91: #{mlp_resnet_forward.1} parent=1 // pred_check_branch
      %148 = sbr.rel (0) target = $region93
    $region92: #{mlp_resnet_forward.1} parent=1 // pred_region
      %150 = dma.done [#allocation12], 1024
    $region93: #{mlp_resnet_forward.1} parent=1 // pred_fallthru
      _
    %v151 = vld [vmem:[%s0] sm:$0xff]
    %v152 = vld [vmem:[%s0 + $0x8] sm:$0xff]
    %v153 = vld [vmem:[#allocation2] sm:$0xf]
    %v154 = vld [vmem:[#allocation2 + $0x4] sm:$0xf]
    %v155 = vld [vmem:[#allocation2 + $0x8] sm:$0xf]
    %v156 = vld [vmem:[#allocation2 + $0xc] sm:$0xf]
    %v157 = vld [vmem:[#allocation2 + $0x10] sm:$0xf]
    %v158 = vld [vmem:[#allocation2 + $0x14] sm:$0xf]
    %v159 = vld [vmem:[#allocation2 + $0x18] sm:$0xf]
    %v160 = vld [vmem:[#allocation2 + $0x1c] sm:$0xf]
    %v161 = vld [vmem:[#allocation2 + $0x20] sm:$0xf]
    %v162 = vld [vmem:[#allocation2 + $0x24] sm:$0xf]
    %v163 = vld [vmem:[#allocation2 + $0x28] sm:$0xf]
    %v164 = vld [vmem:[#allocation2 + $0x2c] sm:$0xf]
    %v165 = vld [vmem:[#allocation2 + $0x30] sm:$0xf]
    %v166 = vld [vmem:[#allocation2 + $0x34] sm:$0xf]
    %v167 = vld [vmem:[#allocation2 + $0x38] sm:$0xf]
    %v168 = vld [vmem:[#allocation2 + $0x3c] sm:$0xf]
    %v169 = vld [vmem:[#allocation2 + $0x40] sm:$0xf]
    %v170 = vld [vmem:[#allocation2 + $0x44] sm:$0xf]
    %v171 = vld [vmem:[#allocation2 + $0x48] sm:$0xf]
    %v172 = vld [vmem:[#allocation2 + $0x4c] sm:$0xf]
    %v173 = vld [vmem:[#allocation2 + $0x50] sm:$0xf]
    %v174 = vld [vmem:[#allocation2 + $0x54] sm:$0xf]
    %v175 = vld [vmem:[#allocation2 + $0x58] sm:$0xf]
    %v176 = vld [vmem:[#allocation2 + $0x5c] sm:$0xf]
    %v177 = vld [vmem:[#allocation2 + $0x60] sm:$0xf]
    %v178 = vld [vmem:[#allocation2 + $0x64] sm:$0xf]
    %v179 = vld [vmem:[#allocation2 + $0x68] sm:$0xf]
    %v180 = vld [vmem:[#allocation2 + $0x6c] sm:$0xf]
    %v181 = vld [vmem:[#allocation2 + $0x70] sm:$0xf]
    %v182 = vld [vmem:[#allocation2 + $0x74] sm:$0xf]
    %v183 = vld [vmem:[#allocation2 + $0x78] sm:$0xf]
    %v184 = vld [vmem:[#allocation2 + $0x7c] sm:$0xf]
    %v185 = vld [vmem:[%s2] sm:$0x1]
    %v187 = vperm.slane %v185, 0
    %v191 = vunpack.c.l.b16 %v151
    %v192 = vunpack.c.h.b16 %v151
    %v193 = vunpack.c.l.b16 %v152
    %v194 = vunpack.c.h.b16 %v152
    %v195 = vpack.c.b16 %v193, %v191
    %v196 = vpack.c.b16 %v194, %v192
    %v231 = vunpack.c.l.b16 %v153
    %v232 = vunpack.c.l.b16 %v154
    %v233 = vunpack.c.l.b16 %v155
    %v234 = vunpack.c.l.b16 %v156
    %v235 = vunpack.c.l.b16 %v157
    %v236 = vunpack.c.l.b16 %v158
    %v237 = vunpack.c.l.b16 %v159
    %v238 = vunpack.c.l.b16 %v160
    %v239 = vunpack.c.l.b16 %v161
    %v240 = vunpack.c.l.b16 %v162
    %v241 = vunpack.c.l.b16 %v163
    %v242 = vunpack.c.l.b16 %v164
    %v243 = vunpack.c.l.b16 %v165
    %v244 = vunpack.c.l.b16 %v166
    %v245 = vunpack.c.l.b16 %v167
    %v246 = vunpack.c.l.b16 %v168
    %v247 = vunpack.c.l.b16 %v169
    %v248 = vunpack.c.l.b16 %v170
    %v249 = vunpack.c.l.b16 %v171
    %v250 = vunpack.c.l.b16 %v172
    %v251 = vunpack.c.l.b16 %v173
    %v252 = vunpack.c.l.b16 %v174
    %v253 = vunpack.c.l.b16 %v175
    %v254 = vunpack.c.l.b16 %v176
    %v255 = vunpack.c.l.b16 %v177
    %v256 = vunpack.c.l.b16 %v178
    %v257 = vunpack.c.l.b16 %v179
    %v258 = vunpack.c.l.b16 %v180
    %v259 = vunpack.c.l.b16 %v181
    %v260 = vunpack.c.l.b16 %v182
    %v261 = vunpack.c.l.b16 %v183
    %v262 = vunpack.c.l.b16 %v184
    %v263 = vpack.c.b16 %v232, %v231
    %v264 = vpack.c.b16 %v234, %v233
    %v265 = vpack.c.b16 %v236, %v235
    %v266 = vpack.c.b16 %v238, %v237
    %v267 = vpack.c.b16 %v240, %v239
    %v268 = vpack.c.b16 %v242, %v241
    %v269 = vpack.c.b16 %v244, %v243
    %v270 = vpack.c.b16 %v246, %v245
    %v271 = vpack.c.b16 %v248, %v247
    %v272 = vpack.c.b16 %v250, %v249
    %v273 = vpack.c.b16 %v252, %v251
    %v274 = vpack.c.b16 %v254, %v253
    %v275 = vpack.c.b16 %v256, %v255
    %v276 = vpack.c.b16 %v258, %v257
    %v277 = vpack.c.b16 %v260, %v259
    %v278 = vpack.c.b16 %v262, %v261
    %295 = vmatpush.bf16.msra.mxu0 %v270
    %296 = vmatpush.bf16.msra.mxu0 %v269
    %297 = vmatpush.bf16.msra.mxu0 %v268
    %298 = vmatpush.bf16.msra.mxu0 %v267
    %299 = vmatpush.bf16.msra.mxu0 %v266
    %300 = vmatpush.bf16.msra.mxu0 %v265
    %301 = vmatpush.bf16.msra.mxu0 %v264
    %302 = vmatpush.bf16.msra.mxu0 %v263
    %303 = vmatmul.bf16.gmra.mxu0 %v195
    %v304 = vpop.f32.mrf.mxu0
    %v305 = vadd.f32 %v187, %v304
    %v306 = vpop.f32.mrf.mxu0
    %v307 = vadd.f32 %v187, %v306
    %308 = vdwg.mxu0
    %309 = vmatpush.bf16.msra.mxu0 %v278
    %310 = vmatpush.bf16.msra.mxu0 %v277
    %311 = vmatpush.bf16.msra.mxu0 %v276
    %312 = vmatpush.bf16.msra.mxu0 %v275
    %313 = vmatpush.bf16.msra.mxu0 %v274
    %314 = vmatpush.bf16.msra.mxu0 %v273
    %315 = vmatpush.bf16.msra.mxu0 %v272
    %316 = vmatpush.bf16.msra.mxu0 %v271
    %317 = vmatmul.bf16.gmra.mxu0 %v196
    %v318 = vpop.f32.mrf.mxu0
    %v319 = vadd.f32 %v305, %v318
    %v320 = vpop.f32.mrf.mxu0
    %v321 = vadd.f32 %v307, %v320
    %322 = vdwg.mxu0
    %323 = vadd.xlane.f32.xlu0 %v319
    %v324 = vpop.xlane.xlu0 %323
    %325 = vadd.xlane.f32.xlu0 %v321
    %v326 = vpop.xlane.xlu0 %325
    %v327 = vrcp.pop 128.0
    %v328 = vmul.f32 128.0, %v327
    %v329 = vsub.f32 1.0, %v328
    %v330 = vmul.f32 %v327, %v329
    %v331 = vadd.f32 %v327, %v330
    %vm332 = vweird.f32 %v327
    %v333 = vsel %vm332, %v327, %v331
    %v334 = vmul.f32 %v324, %v333
    %v335 = vmul.f32 %v326, %v333
    %v336 = vsub.f32 %v319, %v334
    %v337 = vsub.f32 %v321, %v335
    %v338 = vmul.f32 %v336, %v336
    %v339 = vmul.f32 %v337, %v337
    %340 = vadd.xlane.f32.xlu0 %v338
    %v341 = vpop.xlane.xlu0 %340
    %342 = vadd.xlane.f32.xlu0 %v339
    %v343 = vpop.xlane.xlu0 %342
    %v344 = vmul.f32 %v341, %v333
    %v345 = vmul.f32 %v343, %v333
    %v346 = vadd.f32 %v344, 1e-05
    %v347 = vadd.f32 %v345, 1e-05
    %v348 = vrsqrt.pop %v346
    %v349 = vmul.f32 %v348, %v346
    %v350 = vmul.f32 %v349, %v348
    %v351 = vmul.f32 0.5, %v350
    %v352 = vsub.f32 1.5, %v351
    %v353 = vmul.f32 %v348, %v352
    %vm354 = vweird.f32 %v346
    %vm355 = vweird.f32 %v348
    %vm356 = vmor %vm354, %vm355
    %v357 = vsel %vm356, %v348, %v353
    %v358 = vrsqrt.pop %v347
    %v359 = vmul.f32 %v358, %v347
    %v360 = vmul.f32 %v359, %v358
    %v361 = vmul.f32 0.5, %v360
    %v362 = vsub.f32 1.5, %v361
    %v363 = vmul.f32 %v358, %v362
    %vm364 = vweird.f32 %v347
    %vm365 = vweird.f32 %v358
    %vm366 = vmor %vm364, %vm365
    %v367 = vsel %vm366, %v358, %v363
    %v368 = vmul.f32 %v336, %v357
    %v369 = vmul.f32 %v337, %v367
    %v370 = vld [vmem:[%s3] sm:$0x1]
    %v372 = vperm.slane %v370, 0
    %v374 = vmul.f32 %v368, %v372
    %v375 = vmul.f32 %v369, %v372
    %v376 = vld [vmem:[%s4] sm:$0x1]
    %v378 = vperm.slane %v376, 0
    %v380 = vadd.f32 %v374, %v378
    %v381 = vadd.f32 %v375, %v378
    %v382 = vpack.c.bf16 %v381, %v380
    %v383 = vld [vmem:[#allocation5] sm:$0xff]
    %v384 = vld [vmem:[#allocation5 + $0x8] sm:$0xff]
    %v385 = vld [vmem:[#allocation5 + $0x10] sm:$0xff]
    %v386 = vld [vmem:[#allocation5 + $0x18] sm:$0xff]
    %v387 = vld [vmem:[#allocation5 + $0x20] sm:$0xff]
    %v388 = vld [vmem:[#allocation5 + $0x28] sm:$0xff]
    %v389 = vld [vmem:[#allocation5 + $0x30] sm:$0xff]
    %v390 = vld [vmem:[#allocation5 + $0x38] sm:$0xff]
    %v391 = vld [vmem:[#allocation5 + $0x40] sm:$0xff]
    %v392 = vld [vmem:[#allocation5 + $0x48] sm:$0xff]
    %v393 = vld [vmem:[#allocation5 + $0x50] sm:$0xff]
    %v394 = vld [vmem:[#allocation5 + $0x58] sm:$0xff]
    %v395 = vld [vmem:[#allocation5 + $0x60] sm:$0xff]
    %v396 = vld [vmem:[#allocation5 + $0x68] sm:$0xff]
    %v397 = vld [vmem:[#allocation5 + $0x70] sm:$0xff]
    %v398 = vld [vmem:[#allocation5 + $0x78] sm:$0xff]
    %v399 = vld [vmem:[#allocation5 + $0x80] sm:$0xff]
    %v400 = vld [vmem:[#allocation5 + $0x88] sm:$0xff]
    %v401 = vld [vmem:[#allocation5 + $0x90] sm:$0xff]
    %v402 = vld [vmem:[#allocation5 + $0x98] sm:$0xff]
    %v403 = vld [vmem:[#allocation5 + $0xa0] sm:$0xff]
    %v404 = vld [vmem:[#allocation5 + $0xa8] sm:$0xff]
    %v405 = vld [vmem:[#allocation5 + $0xb0] sm:$0xff]
    %v406 = vld [vmem:[#allocation5 + $0xb8] sm:$0xff]
    %v407 = vld [vmem:[#allocation5 + $0xc0] sm:$0xff]
    %v408 = vld [vmem:[#allocation5 + $0xc8] sm:$0xff]
    %v409 = vld [vmem:[#allocation5 + $0xd0] sm:$0xff]
    %v410 = vld [vmem:[#allocation5 + $0xd8] sm:$0xff]
    %v411 = vld [vmem:[#allocation5 + $0xe0] sm:$0xff]
    %v412 = vld [vmem:[#allocation5 + $0xe8] sm:$0xff]
    %v413 = vld [vmem:[#allocation5 + $0xf0] sm:$0xff]
    %v414 = vld [vmem:[#allocation5 + $0xf8] sm:$0xff]
    %v415 = vld [vmem:[%s6] sm:$0xf]
    %v417 = vperm.slane %v415, 0
    %v418 = vperm.slane %v415, 1
    %v419 = vperm.slane %v415, 2
    %v420 = vperm.slane %v415, 3
    %v457 = vunpack.c.l.b16 %v383
    %v458 = vunpack.c.h.b16 %v383
    %v459 = vunpack.c.l.b16 %v384
    %v460 = vunpack.c.h.b16 %v384
    %v461 = vunpack.c.l.b16 %v385
    %v462 = vunpack.c.h.b16 %v385
    %v463 = vunpack.c.l.b16 %v386
    %v464 = vunpack.c.h.b16 %v386
    %v465 = vunpack.c.l.b16 %v387
    %v466 = vunpack.c.h.b16 %v387
    %v467 = vunpack.c.l.b16 %v388
    %v468 = vunpack.c.h.b16 %v388
    %v469 = vunpack.c.l.b16 %v389
    %v470 = vunpack.c.h.b16 %v389
    %v471 = vunpack.c.l.b16 %v390
    %v472 = vunpack.c.h.b16 %v390
    %v473 = vunpack.c.l.b16 %v391
    %v474 = vunpack.c.h.b16 %v391
    %v475 = vunpack.c.l.b16 %v392
    %v476 = vunpack.c.h.b16 %v392
    %v477 = vunpack.c.l.b16 %v393
    %v478 = vunpack.c.h.b16 %v393
    %v479 = vunpack.c.l.b16 %v394
    %v480 = vunpack.c.h.b16 %v394
    %v481 = vunpack.c.l.b16 %v395
    %v482 = vunpack.c.h.b16 %v395
    %v483 = vunpack.c.l.b16 %v396
    %v484 = vunpack.c.h.b16 %v396
    %v485 = vunpack.c.l.b16 %v397
    %v486 = vunpack.c.h.b16 %v397
    %v487 = vunpack.c.l.b16 %v398
    %v488 = vunpack.c.h.b16 %v398
    %v489 = vunpack.c.l.b16 %v399
    %v490 = vunpack.c.h.b16 %v399
    %v491 = vunpack.c.l.b16 %v400
    %v492 = vunpack.c.h.b16 %v400
    %v493 = vunpack.c.l.b16 %v401
    %v494 = vunpack.c.h.b16 %v401
    %v495 = vunpack.c.l.b16 %v402
    %v496 = vunpack.c.h.b16 %v402
    %v497 = vunpack.c.l.b16 %v403
    %v498 = vunpack.c.h.b16 %v403
    %v499 = vunpack.c.l.b16 %v404
    %v500 = vunpack.c.h.b16 %v404
    %v501 = vunpack.c.l.b16 %v405
    %v502 = vunpack.c.h.b16 %v405
    %v503 = vunpack.c.l.b16 %v406
    %v504 = vunpack.c.h.b16 %v406
    %v505 = vunpack.c.l.b16 %v407
    %v506 = vunpack.c.h.b16 %v407
    %v507 = vunpack.c.l.b16 %v408
    %v508 = vunpack.c.h.b16 %v408
    %v509 = vunpack.c.l.b16 %v409
    %v510 = vunpack.c.h.b16 %v409
    %v511 = vunpack.c.l.b16 %v410
    %v512 = vunpack.c.h.b16 %v410
    %v513 = vunpack.c.l.b16 %v411
    %v514 = vunpack.c.h.b16 %v411
    %v515 = vunpack.c.l.b16 %v412
    %v516 = vunpack.c.h.b16 %v412
    %v517 = vunpack.c.l.b16 %v413
    %v518 = vunpack.c.h.b16 %v413
    %v519 = vunpack.c.l.b16 %v414
    %v520 = vunpack.c.h.b16 %v414
    %v521 = vpack.c.b16 %v461, %v457
    %v522 = vpack.c.b16 %v462, %v458
    %v523 = vpack.c.b16 %v463, %v459
    %v524 = vpack.c.b16 %v464, %v460
    %v525 = vpack.c.b16 %v469, %v465
    %v526 = vpack.c.b16 %v470, %v466
    %v527 = vpack.c.b16 %v471, %v467
    %v528 = vpack.c.b16 %v472, %v468
    %v529 = vpack.c.b16 %v477, %v473
    %v530 = vpack.c.b16 %v478, %v474
    %v531 = vpack.c.b16 %v479, %v475
    %v532 = vpack.c.b16 %v480, %v476
    %v533 = vpack.c.b16 %v485, %v481
    %v534 = vpack.c.b16 %v486, %v482
    %v535 = vpack.c.b16 %v487, %v483
    %v536 = vpack.c.b16 %v488, %v484
    %v537 = vpack.c.b16 %v493, %v489
    %v538 = vpack.c.b16 %v494, %v490
    %v539 = vpack.c.b16 %v495, %v491
    %v540 = vpack.c.b16 %v496, %v492
    %v541 = vpack.c.b16 %v501, %v497
    %v542 = vpack.c.b16 %v502, %v498
    %v543 = vpack.c.b16 %v503, %v499
    %v544 = vpack.c.b16 %v504, %v500
    %v545 = vpack.c.b16 %v509, %v505
    %v546 = vpack.c.b16 %v510, %v506
    %v547 = vpack.c.b16 %v511, %v507
    %v548 = vpack.c.b16 %v512, %v508
    %v549 = vpack.c.b16 %v517, %v513
    %v550 = vpack.c.b16 %v518, %v514
    %v551 = vpack.c.b16 %v519, %v515
    %v552 = vpack.c.b16 %v520, %v516
    %585 = vmatpush.bf16.msra.mxu0 %v549
    %586 = vmatpush.bf16.msra.mxu0 %v545
    %587 = vmatpush.bf16.msra.mxu0 %v541
    %588 = vmatpush.bf16.msra.mxu0 %v537
    %589 = vmatpush.bf16.msra.mxu0 %v533
    %590 = vmatpush.bf16.msra.mxu0 %v529
    %591 = vmatpush.bf16.msra.mxu0 %v525
    %592 = vmatpush.bf16.msra.mxu0 %v521
    %593 = vmatmul.bf16.gmra.mxu0 %v382
    %v594 = vpop.f32.mrf.mxu0
    %v595 = vadd.f32 %v417, %v594
    %v596 = vpop.f32.mrf.mxu0
    %v597 = vadd.f32 %v417, %v596
    %598 = vdwg.mxu0
    %599 = vmatpush.bf16.msra.mxu0 %v550
    %600 = vmatpush.bf16.msra.mxu0 %v546
    %601 = vmatpush.bf16.msra.mxu0 %v542
    %602 = vmatpush.bf16.msra.mxu0 %v538
    %603 = vmatpush.bf16.msra.mxu0 %v534
    %604 = vmatpush.bf16.msra.mxu0 %v530
    %605 = vmatpush.bf16.msra.mxu0 %v526
    %606 = vmatpush.bf16.msra.mxu0 %v522
    %607 = vmatmul.bf16.gmra.mxu0 %v382
    %v608 = vpop.f32.mrf.mxu0
    %v609 = vadd.f32 %v418, %v608
    %v610 = vpop.f32.mrf.mxu0
    %v611 = vadd.f32 %v418, %v610
    %612 = vdwg.mxu0
    %613 = vmatpush.bf16.msra.mxu0 %v551
    %614 = vmatpush.bf16.msra.mxu0 %v547
    %615 = vmatpush.bf16.msra.mxu0 %v543
    %616 = vmatpush.bf16.msra.mxu0 %v539
    %617 = vmatpush.bf16.msra.mxu0 %v535
    %618 = vmatpush.bf16.msra.mxu0 %v531
    %619 = vmatpush.bf16.msra.mxu0 %v527
    %620 = vmatpush.bf16.msra.mxu0 %v523
    %621 = vmatmul.bf16.gmra.mxu0 %v382
    %v622 = vpop.f32.mrf.mxu0
    %v623 = vadd.f32 %v419, %v622
    %v624 = vpop.f32.mrf.mxu0
    %v625 = vadd.f32 %v419, %v624
    %626 = vdwg.mxu0
    %627 = vmatpush.bf16.msra.mxu0 %v552
    %628 = vmatpush.bf16.msra.mxu0 %v548
    %629 = vmatpush.bf16.msra.mxu0 %v544
    %630 = vmatpush.bf16.msra.mxu0 %v540
    %631 = vmatpush.bf16.msra.mxu0 %v536
    %632 = vmatpush.bf16.msra.mxu0 %v532
    %633 = vmatpush.bf16.msra.mxu0 %v528
    %634 = vmatpush.bf16.msra.mxu0 %v524
    %635 = vmatmul.bf16.gmra.mxu0 %v382
    %v636 = vpop.f32.mrf.mxu0
    %v637 = vadd.f32 %v420, %v636
    %v638 = vpop.f32.mrf.mxu0
    %v639 = vadd.f32 %v420, %v638
    %640 = vdwg.mxu0
    %v641 = vmax.f32 %v595, 0.0
    %v642 = vmax.f32 %v609, 0.0
    %v643 = vmax.f32 %v623, 0.0
    %v644 = vmax.f32 %v637, 0.0
    %v645 = vmax.f32 %v597, 0.0
    %v646 = vmax.f32 %v611, 0.0
    %v647 = vmax.f32 %v625, 0.0
    %v648 = vmax.f32 %v639, 0.0
    %v649 = vpack.c.bf16 %v645, %v641
    %v650 = vpack.c.bf16 %v646, %v642
    %v651 = vpack.c.bf16 %v647, %v643
    %v652 = vpack.c.bf16 %v648, %v644
    %v653 = vld [vmem:[#allocation7] sm:$0xf]
    %v654 = vld [vmem:[#allocation7 + $0x4] sm:$0xf]
    %v655 = vld [vmem:[#allocation7 + $0x8] sm:$0xf]
    %v656 = vld [vmem:[#allocation7 + $0xc] sm:$0xf]
    %v657 = vld [vmem:[#allocation7 + $0x10] sm:$0xf]
    %v658 = vld [vmem:[#allocation7 + $0x14] sm:$0xf]
    %v659 = vld [vmem:[#allocation7 + $0x18] sm:$0xf]
    %v660 = vld [vmem:[#allocation7 + $0x1c] sm:$0xf]
    %v661 = vld [vmem:[#allocation7 + $0x20] sm:$0xf]
    %v662 = vld [vmem:[#allocation7 + $0x24] sm:$0xf]
    %v663 = vld [vmem:[#allocation7 + $0x28] sm:$0xf]
    %v664 = vld [vmem:[#allocation7 + $0x2c] sm:$0xf]
    %v665 = vld [vmem:[#allocation7 + $0x30] sm:$0xf]
    %v666 = vld [vmem:[#allocation7 + $0x34] sm:$0xf]
    %v667 = vld [vmem:[#allocation7 + $0x38] sm:$0xf]
    %v668 = vld [vmem:[#allocation7 + $0x3c] sm:$0xf]
    %v669 = vld [vmem:[#allocation7 + $0x40] sm:$0xf]
    %v670 = vld [vmem:[#allocation7 + $0x44] sm:$0xf]
    %v671 = vld [vmem:[#allocation7 + $0x48] sm:$0xf]
    %v672 = vld [vmem:[#allocation7 + $0x4c] sm:$0xf]
    %v673 = vld [vmem:[#allocation7 + $0x50] sm:$0xf]
    %v674 = vld [vmem:[#allocation7 + $0x54] sm:$0xf]
    %v675 = vld [vmem:[#allocation7 + $0x58] sm:$0xf]
    %v676 = vld [vmem:[#allocation7 + $0x5c] sm:$0xf]
    %v677 = vld [vmem:[#allocation7 + $0x60] sm:$0xf]
    %v678 = vld [vmem:[#allocation7 + $0x64] sm:$0xf]
    %v679 = vld [vmem:[#allocation7 + $0x68] sm:$0xf]
    %v680 = vld [vmem:[#allocation7 + $0x6c] sm:$0xf]
    %v681 = vld [vmem:[#allocation7 + $0x70] sm:$0xf]
    %v682 = vld [vmem:[#allocation7 + $0x74] sm:$0xf]
    %v683 = vld [vmem:[#allocation7 + $0x78] sm:$0xf]
    %v684 = vld [vmem:[#allocation7 + $0x7c] sm:$0xf]
    %v685 = vld [vmem:[#allocation7 + $0x80] sm:$0xf]
    %v686 = vld [vmem:[#allocation7 + $0x84] sm:$0xf]
    %v687 = vld [vmem:[#allocation7 + $0x88] sm:$0xf]
    %v688 = vld [vmem:[#allocation7 + $0x8c] sm:$0xf]
    %v689 = vld [vmem:[#allocation7 + $0x90] sm:$0xf]
    %v690 = vld [vmem:[#allocation7 + $0x94] sm:$0xf]
    %v691 = vld [vmem:[#allocation7 + $0x98] sm:$0xf]
    %v692 = vld [vmem:[#allocation7 + $0x9c] sm:$0xf]
    %v693 = vld [vmem:[#allocation7 + $0xa0] sm:$0xf]
    %v694 = vld [vmem:[#allocation7 + $0xa4] sm:$0xf]
    %v695 = vld [vmem:[#allocation7 + $0xa8] sm:$0xf]
    %v696 = vld [vmem:[#allocation7 + $0xac] sm:$0xf]
    %v697 = vld [vmem:[#allocation7 + $0xb0] sm:$0xf]
    %v698 = vld [vmem:[#allocation7 + $0xb4] sm:$0xf]
    %v699 = vld [vmem:[#allocation7 + $0xb8] sm:$0xf]
    %v700 = vld [vmem:[#allocation7 + $0xbc] sm:$0xf]
    %v701 = vld [vmem:[#allocation7 + $0xc0] sm:$0xf]
    %v702 = vld [vmem:[#allocation7 + $0xc4] sm:$0xf]
    %v703 = vld [vmem:[#allocation7 + $0xc8] sm:$0xf]
    %v704 = vld [vmem:[#allocation7 + $0xcc] sm:$0xf]
    %v705 = vld [vmem:[#allocation7 + $0xd0] sm:$0xf]
    %v706 = vld [vmem:[#allocation7 + $0xd4] sm:$0xf]
    %v707 = vld [vmem:[#allocation7 + $0xd8] sm:$0xf]
    %v708 = vld [vmem:[#allocation7 + $0xdc] sm:$0xf]
    %v709 = vld [vmem:[#allocation7 + $0xe0] sm:$0xf]
    %v710 = vld [vmem:[#allocation7 + $0xe4] sm:$0xf]
    %v711 = vld [vmem:[#allocation7 + $0xe8] sm:$0xf]
    %v712 = vld [vmem:[#allocation7 + $0xec] sm:$0xf]
    %v713 = vld [vmem:[#allocation7 + $0xf0] sm:$0xf]
    %v714 = vld [vmem:[#allocation7 + $0xf4] sm:$0xf]
    %v715 = vld [vmem:[#allocation7 + $0xf8] sm:$0xf]
    %v716 = vld [vmem:[#allocation7 + $0xfc] sm:$0xf]
    %v717 = vld [vmem:[%s8] sm:$0x1]
    %v719 = vperm.slane %v717, 0
    %v785 = vunpack.c.l.b16 %v653
    %v786 = vunpack.c.l.b16 %v654
    %v787 = vunpack.c.l.b16 %v655
    %v788 = vunpack.c.l.b16 %v656
    %v789 = vunpack.c.l.b16 %v657
    %v790 = vunpack.c.l.b16 %v658
    %v791 = vunpack.c.l.b16 %v659
    %v792 = vunpack.c.l.b16 %v660
    %v793 = vunpack.c.l.b16 %v661
    %v794 = vunpack.c.l.b16 %v662
    %v795 = vunpack.c.l.b16 %v663
    %v796 = vunpack.c.l.b16 %v664
    %v797 = vunpack.c.l.b16 %v665
    %v798 = vunpack.c.l.b16 %v666
    %v799 = vunpack.c.l.b16 %v667
    %v800 = vunpack.c.l.b16 %v668
    %v801 = vunpack.c.l.b16 %v669
    %v802 = vunpack.c.l.b16 %v670
    %v803 = vunpack.c.l.b16 %v671
    %v804 = vunpack.c.l.b16 %v672
    %v805 = vunpack.c.l.b16 %v673
    %v806 = vunpack.c.l.b16 %v674
    %v807 = vunpack.c.l.b16 %v675
    %v808 = vunpack.c.l.b16 %v676
    %v809 = vunpack.c.l.b16 %v677
    %v810 = vunpack.c.l.b16 %v678
    %v811 = vunpack.c.l.b16 %v679
    %v812 = vunpack.c.l.b16 %v680
    %v813 = vunpack.c.l.b16 %v681
    %v814 = vunpack.c.l.b16 %v682
    %v815 = vunpack.c.l.b16 %v683
    %v816 = vunpack.c.l.b16 %v684
    %v817 = vunpack.c.l.b16 %v685
    %v818 = vunpack.c.l.b16 %v686
    %v819 = vunpack.c.l.b16 %v687
    %v820 = vunpack.c.l.b16 %v688
    %v821 = vunpack.c.l.b16 %v689
    %v822 = vunpack.c.l.b16 %v690
    %v823 = vunpack.c.l.b16 %v691
    %v824 = vunpack.c.l.b16 %v692
    %v825 = vunpack.c.l.b16 %v693
    %v826 = vunpack.c.l.b16 %v694
    %v827 = vunpack.c.l.b16 %v695
    %v828 = vunpack.c.l.b16 %v696
    %v829 = vunpack.c.l.b16 %v697
    %v830 = vunpack.c.l.b16 %v698
    %v831 = vunpack.c.l.b16 %v699
    %v832 = vunpack.c.l.b16 %v700
    %v833 = vunpack.c.l.b16 %v701
    %v834 = vunpack.c.l.b16 %v702
    %v835 = vunpack.c.l.b16 %v703
    %v836 = vunpack.c.l.b16 %v704
    %v837 = vunpack.c.l.b16 %v705
    %v838 = vunpack.c.l.b16 %v706
    %v839 = vunpack.c.l.b16 %v707
    %v840 = vunpack.c.l.b16 %v708
    %v841 = vunpack.c.l.b16 %v709
    %v842 = vunpack.c.l.b16 %v710
    %v843 = vunpack.c.l.b16 %v711
    %v844 = vunpack.c.l.b16 %v712
    %v845 = vunpack.c.l.b16 %v713
    %v846 = vunpack.c.l.b16 %v714
    %v847 = vunpack.c.l.b16 %v715
    %v848 = vunpack.c.l.b16 %v716
    %v849 = vpack.c.b16 %v786, %v785
    %v850 = vpack.c.b16 %v788, %v787
    %v851 = vpack.c.b16 %v790, %v789
    %v852 = vpack.c.b16 %v792, %v791
    %v853 = vpack.c.b16 %v794, %v793
    %v854 = vpack.c.b16 %v796, %v795
    %v855 = vpack.c.b16 %v798, %v797
    %v856 = vpack.c.b16 %v800, %v799
    %v857 = vpack.c.b16 %v802, %v801
    %v858 = vpack.c.b16 %v804, %v803
    %v859 = vpack.c.b16 %v806, %v805
    %v860 = vpack.c.b16 %v808, %v807
    %v861 = vpack.c.b16 %v810, %v809
    %v862 = vpack.c.b16 %v812, %v811
    %v863 = vpack.c.b16 %v814, %v813
    %v864 = vpack.c.b16 %v816, %v815
    %v865 = vpack.c.b16 %v818, %v817
    %v866 = vpack.c.b16 %v820, %v819
    %v867 = vpack.c.b16 %v822, %v821
    %v868 = vpack.c.b16 %v824, %v823
    %v869 = vpack.c.b16 %v826, %v825
    %v870 = vpack.c.b16 %v828, %v827
    %v871 = vpack.c.b16 %v830, %v829
    %v872 = vpack.c.b16 %v832, %v831
    %v873 = vpack.c.b16 %v834, %v833
    %v874 = vpack.c.b16 %v836, %v835
    %v875 = vpack.c.b16 %v838, %v837
    %v876 = vpack.c.b16 %v840, %v839
    %v877 = vpack.c.b16 %v842, %v841
    %v878 = vpack.c.b16 %v844, %v843
    %v879 = vpack.c.b16 %v846, %v845
    %v880 = vpack.c.b16 %v848, %v847
    %913 = vmatpush.bf16.msra.mxu0 %v856
    %914 = vmatpush.bf16.msra.mxu0 %v855
    %915 = vmatpush.bf16.msra.mxu0 %v854
    %916 = vmatpush.bf16.msra.mxu0 %v853
    %917 = vmatpush.bf16.msra.mxu0 %v852
    %918 = vmatpush.bf16.msra.mxu0 %v851
    %919 = vmatpush.bf16.msra.mxu0 %v850
    %920 = vmatpush.bf16.msra.mxu0 %v849
    %921 = vmatmul.bf16.gmra.mxu0 %v649
    %v922 = vpop.f32.mrf.mxu0
    %v923 = vadd.f32 %v719, %v922
    %v924 = vpop.f32.mrf.mxu0
    %v925 = vadd.f32 %v719, %v924
    %926 = vdwg.mxu0
    %927 = vmatpush.bf16.msra.mxu0 %v864
    %928 = vmatpush.bf16.msra.mxu0 %v863
    %929 = vmatpush.bf16.msra.mxu0 %v862
    %930 = vmatpush.bf16.msra.mxu0 %v861
    %931 = vmatpush.bf16.msra.mxu0 %v860
    %932 = vmatpush.bf16.msra.mxu0 %v859
    %933 = vmatpush.bf16.msra.mxu0 %v858
    %934 = vmatpush.bf16.msra.mxu0 %v857
    %935 = vmatmul.bf16.gmra.mxu0 %v650
    %v936 = vpop.f32.mrf.mxu0
    %v937 = vadd.f32 %v923, %v936
    %v938 = vpop.f32.mrf.mxu0
    %v939 = vadd.f32 %v925, %v938
    %940 = vdwg.mxu0
    %941 = vmatpush.bf16.msra.mxu0 %v872
    %942 = vmatpush.bf16.msra.mxu0 %v871
    %943 = vmatpush.bf16.msra.mxu0 %v870
    %944 = vmatpush.bf16.msra.mxu0 %v869
    %945 = vmatpush.bf16.msra.mxu0 %v868
    %946 = vmatpush.bf16.msra.mxu0 %v867
    %947 = vmatpush.bf16.msra.mxu0 %v866
    %948 = vmatpush.bf16.msra.mxu0 %v865
    %949 = vmatmul.bf16.gmra.mxu0 %v651
    %v950 = vpop.f32.mrf.mxu0
    %v951 = vadd.f32 %v937, %v950
    %v952 = vpop.f32.mrf.mxu0
    %v953 = vadd.f32 %v939, %v952
    %954 = vdwg.mxu0
    %955 = vmatpush.bf16.msra.mxu0 %v880
    %956 = vmatpush.bf16.msra.mxu0 %v879
    %957 = vmatpush.bf16.msra.mxu0 %v878
    %958 = vmatpush.bf16.msra.mxu0 %v877
    %959 = vmatpush.bf16.msra.mxu0 %v876
    %960 = vmatpush.bf16.msra.mxu0 %v875
    %961 = vmatpush.bf16.msra.mxu0 %v874
    %962 = vmatpush.bf16.msra.mxu0 %v873
    %963 = vmatmul.bf16.gmra.mxu0 %v652
    %v964 = vpop.f32.mrf.mxu0
    %v965 = vadd.f32 %v951, %v964
    %v966 = vpop.f32.mrf.mxu0
    %v967 = vadd.f32 %v953, %v966
    %968 = vdwg.mxu0
    %v969 = vadd.f32 %v319, %v965
    %v970 = vadd.f32 %v321, %v967
    %971 = vadd.xlane.f32.xlu0 %v969
    %v972 = vpop.xlane.xlu0 %971
    %973 = vadd.xlane.f32.xlu0 %v970
    %v974 = vpop.xlane.xlu0 %973
    %v975 = vmul.f32 %v972, %v333
    %v976 = vmul.f32 %v974, %v333
    %v977 = vsub.f32 %v969, %v975
    %v978 = vsub.f32 %v970, %v976
    %v979 = vmul.f32 %v977, %v977
    %v980 = vmul.f32 %v978, %v978
    %981 = vadd.xlane.f32.xlu0 %v979
    %v982 = vpop.xlane.xlu0 %981
    %983 = vadd.xlane.f32.xlu0 %v980
    %v984 = vpop.xlane.xlu0 %983
    %v985 = vmul.f32 %v982, %v333
    %v986 = vmul.f32 %v984, %v333
    %v987 = vadd.f32 %v985, 1e-05
    %v988 = vadd.f32 %v986, 1e-05
    %v989 = vrsqrt.pop %v987
    %v990 = vmul.f32 %v989, %v987
    %v991 = vmul.f32 %v990, %v989
    %v992 = vmul.f32 0.5, %v991
    %v993 = vsub.f32 1.5, %v992
    %v994 = vmul.f32 %v989, %v993
    %vm995 = vweird.f32 %v987
    %vm996 = vweird.f32 %v989
    %vm997 = vmor %vm995, %vm996
    %v998 = vsel %vm997, %v989, %v994
    %v999 = vrsqrt.pop %v988
    %v1000 = vmul.f32 %v999, %v988
    %v1001 = vmul.f32 %v1000, %v999
    %v1002 = vmul.f32 0.5, %v1001
    %v1003 = vsub.f32 1.5, %v1002
    %v1004 = vmul.f32 %v999, %v1003
    %vm1005 = vweird.f32 %v988
    %vm1006 = vweird.f32 %v999
    %vm1007 = vmor %vm1005, %vm1006
    %v1008 = vsel %vm1007, %v999, %v1004
    %v1009 = vmul.f32 %v977, %v998
    %v1010 = vmul.f32 %v978, %v1008
    %v1011 = vld [vmem:[%s9] sm:$0x1]
    %v1013 = vperm.slane %v1011, 0
    %v1015 = vmul.f32 %v1009, %v1013
    %v1016 = vmul.f32 %v1010, %v1013
    %v1017 = vld [vmem:[%s10] sm:$0x1]
    %v1019 = vperm.slane %v1017, 0
    %v1021 = vadd.f32 %v1015, %v1019
    %v1022 = vadd.f32 %v1016, %v1019
    %v1023 = vpack.c.bf16 %v1022, %v1021
    %v1024 = vld [vmem:[#allocation8] sm:$0xff]
    %v1025 = vld [vmem:[#allocation8 + $0x8] sm:$0xff]
    %v1026 = vld [vmem:[#allocation8 + $0x10] sm:$0xff]
    %v1027 = vld [vmem:[#allocation8 + $0x18] sm:$0xff]
    %v1028 = vld [vmem:[#allocation8 + $0x20] sm:$0xff]
    %v1029 = vld [vmem:[#allocation8 + $0x28] sm:$0xff]
    %v1030 = vld [vmem:[#allocation8 + $0x30] sm:$0xff]
    %v1031 = vld [vmem:[#allocation8 + $0x38] sm:$0xff]
    %v1032 = vld [vmem:[#allocation8 + $0x40] sm:$0xff]
    %v1033 = vld [vmem:[#allocation8 + $0x48] sm:$0xff]
    %v1034 = vld [vmem:[#allocation8 + $0x50] sm:$0xff]
    %v1035 = vld [vmem:[#allocation8 + $0x58] sm:$0xff]
    %v1036 = vld [vmem:[#allocation8 + $0x60] sm:$0xff]
    %v1037 = vld [vmem:[#allocation8 + $0x68] sm:$0xff]
    %v1038 = vld [vmem:[#allocation8 + $0x70] sm:$0xff]
    %v1039 = vld [vmem:[#allocation8 + $0x78] sm:$0xff]
    %v1040 = vld [vmem:[#allocation8 + $0x80] sm:$0xff]
    %v1041 = vld [vmem:[#allocation8 + $0x88] sm:$0xff]
    %v1042 = vld [vmem:[#allocation8 + $0x90] sm:$0xff]
    %v1043 = vld [vmem:[#allocation8 + $0x98] sm:$0xff]
    %v1044 = vld [vmem:[#allocation8 + $0xa0] sm:$0xff]
    %v1045 = vld [vmem:[#allocation8 + $0xa8] sm:$0xff]
    %v1046 = vld [vmem:[#allocation8 + $0xb0] sm:$0xff]
    %v1047 = vld [vmem:[#allocation8 + $0xb8] sm:$0xff]
    %v1048 = vld [vmem:[#allocation8 + $0xc0] sm:$0xff]
    %v1049 = vld [vmem:[#allocation8 + $0xc8] sm:$0xff]
    %v1050 = vld [vmem:[#allocation8 + $0xd0] sm:$0xff]
    %v1051 = vld [vmem:[#allocation8 + $0xd8] sm:$0xff]
    %v1052 = vld [vmem:[#allocation8 + $0xe0] sm:$0xff]
    %v1053 = vld [vmem:[#allocation8 + $0xe8] sm:$0xff]
    %v1054 = vld [vmem:[#allocation8 + $0xf0] sm:$0xff]
    %v1055 = vld [vmem:[#allocation8 + $0xf8] sm:$0xff]
    %v1056 = vld [vmem:[%s12] sm:$0xf]
    %v1058 = vperm.slane %v1056, 0
    %v1059 = vperm.slane %v1056, 1
    %v1060 = vperm.slane %v1056, 2
    %v1061 = vperm.slane %v1056, 3
    %v1098 = vunpack.c.l.b16 %v1024
    %v1099 = vunpack.c.h.b16 %v1024
    %v1100 = vunpack.c.l.b16 %v1025
    %v1101 = vunpack.c.h.b16 %v1025
    %v1102 = vunpack.c.l.b16 %v1026
    %v1103 = vunpack.c.h.b16 %v1026
    %v1104 = vunpack.c.l.b16 %v1027
    %v1105 = vunpack.c.h.b16 %v1027
    %v1106 = vunpack.c.l.b16 %v1028
    %v1107 = vunpack.c.h.b16 %v1028
    %v1108 = vunpack.c.l.b16 %v1029
    %v1109 = vunpack.c.h.b16 %v1029
    %v1110 = vunpack.c.l.b16 %v1030
    %v1111 = vunpack.c.h.b16 %v1030
    %v1112 = vunpack.c.l.b16 %v1031
    %v1113 = vunpack.c.h.b16 %v1031
    %v1114 = vunpack.c.l.b16 %v1032
    %v1115 = vunpack.c.h.b16 %v1032
    %v1116 = vunpack.c.l.b16 %v1033
    %v1117 = vunpack.c.h.b16 %v1033
    %v1118 = vunpack.c.l.b16 %v1034
    %v1119 = vunpack.c.h.b16 %v1034
    %v1120 = vunpack.c.l.b16 %v1035
    %v1121 = vunpack.c.h.b16 %v1035
    %v1122 = vunpack.c.l.b16 %v1036
    %v1123 = vunpack.c.h.b16 %v1036
    %v1124 = vunpack.c.l.b16 %v1037
    %v1125 = vunpack.c.h.b16 %v1037
    %v1126 = vunpack.c.l.b16 %v1038
    %v1127 = vunpack.c.h.b16 %v1038
    %v1128 = vunpack.c.l.b16 %v1039
    %v1129 = vunpack.c.h.b16 %v1039
    %v1130 = vunpack.c.l.b16 %v1040
    %v1131 = vunpack.c.h.b16 %v1040
    %v1132 = vunpack.c.l.b16 %v1041
    %v1133 = vunpack.c.h.b16 %v1041
    %v1134 = vunpack.c.l.b16 %v1042
    %v1135 = vunpack.c.h.b16 %v1042
    %v1136 = vunpack.c.l.b16 %v1043
    %v1137 = vunpack.c.h.b16 %v1043
    %v1138 = vunpack.c.l.b16 %v1044
    %v1139 = vunpack.c.h.b16 %v1044
    %v1140 = vunpack.c.l.b16 %v1045
    %v1141 = vunpack.c.h.b16 %v1045
    %v1142 = vunpack.c.l.b16 %v1046
    %v1143 = vunpack.c.h.b16 %v1046
    %v1144 = vunpack.c.l.b16 %v1047
    %v1145 = vunpack.c.h.b16 %v1047
    %v1146 = vunpack.c.l.b16 %v1048
    %v1147 = vunpack.c.h.b16 %v1048
    %v1148 = vunpack.c.l.b16 %v1049
    %v1149 = vunpack.c.h.b16 %v1049
    %v1150 = vunpack.c.l.b16 %v1050
    %v1151 = vunpack.c.h.b16 %v1050
    %v1152 = vunpack.c.l.b16 %v1051
    %v1153 = vunpack.c.h.b16 %v1051
    %v1154 = vunpack.c.l.b16 %v1052
    %v1155 = vunpack.c.h.b16 %v1052
    %v1156 = vunpack.c.l.b16 %v1053
    %v1157 = vunpack.c.h.b16 %v1053
    %v1158 = vunpack.c.l.b16 %v1054
    %v1159 = vunpack.c.h.b16 %v1054
    %v1160 = vunpack.c.l.b16 %v1055
    %v1161 = vunpack.c.h.b16 %v1055
    %v1162 = vpack.c.b16 %v1102, %v1098
    %v1163 = vpack.c.b16 %v1103, %v1099
    %v1164 = vpack.c.b16 %v1104, %v1100
    %v1165 = vpack.c.b16 %v1105, %v1101
    %v1166 = vpack.c.b16 %v1110, %v1106
    %v1167 = vpack.c.b16 %v1111, %v1107
    %v1168 = vpack.c.b16 %v1112, %v1108
    %v1169 = vpack.c.b16 %v1113, %v1109
    %v1170 = vpack.c.b16 %v1118, %v1114
    %v1171 = vpack.c.b16 %v1119, %v1115
    %v1172 = vpack.c.b16 %v1120, %v1116
    %v1173 = vpack.c.b16 %v1121, %v1117
    %v1174 = vpack.c.b16 %v1126, %v1122
    %v1175 = vpack.c.b16 %v1127, %v1123
    %v1176 = vpack.c.b16 %v1128, %v1124
    %v1177 = vpack.c.b16 %v1129, %v1125
    %v1178 = vpack.c.b16 %v1134, %v1130
    %v1179 = vpack.c.b16 %v1135, %v1131
    %v1180 = vpack.c.b16 %v1136, %v1132
    %v1181 = vpack.c.b16 %v1137, %v1133
    %v1182 = vpack.c.b16 %v1142, %v1138
    %v1183 = vpack.c.b16 %v1143, %v1139
    %v1184 = vpack.c.b16 %v1144, %v1140
    %v1185 = vpack.c.b16 %v1145, %v1141
    %v1186 = vpack.c.b16 %v1150, %v1146
    %v1187 = vpack.c.b16 %v1151, %v1147
    %v1188 = vpack.c.b16 %v1152, %v1148
    %v1189 = vpack.c.b16 %v1153, %v1149
    %v1190 = vpack.c.b16 %v1158, %v1154
    %v1191 = vpack.c.b16 %v1159, %v1155
    %v1192 = vpack.c.b16 %v1160, %v1156
    %v1193 = vpack.c.b16 %v1161, %v1157
    %1226 = vmatpush.bf16.msra.mxu0 %v1190
    %1227 = vmatpush.bf16.msra.mxu0 %v1186
    %1228 = vmatpush.bf16.msra.mxu0 %v1182
    %1229 = vmatpush.bf16.msra.mxu0 %v1178
    %1230 = vmatpush.bf16.msra.mxu0 %v1174
    %1231 = vmatpush.bf16.msra.mxu0 %v1170
    %1232 = vmatpush.bf16.msra.mxu0 %v1166
    %1233 = vmatpush.bf16.msra.mxu0 %v1162
    %1234 = vmatmul.bf16.gmra.mxu0 %v1023
    %v1235 = vpop.f32.mrf.mxu0
    %v1236 = vadd.f32 %v1058, %v1235
    %v1237 = vpop.f32.mrf.mxu0
    %v1238 = vadd.f32 %v1058, %v1237
    %1239 = vdwg.mxu0
    %1240 = vmatpush.bf16.msra.mxu0 %v1191
    %1241 = vmatpush.bf16.msra.mxu0 %v1187
    %1242 = vmatpush.bf16.msra.mxu0 %v1183
    %1243 = vmatpush.bf16.msra.mxu0 %v1179
    %1244 = vmatpush.bf16.msra.mxu0 %v1175
    %1245 = vmatpush.bf16.msra.mxu0 %v1171
    %1246 = vmatpush.bf16.msra.mxu0 %v1167
    %1247 = vmatpush.bf16.msra.mxu0 %v1163
    %1248 = vmatmul.bf16.gmra.mxu0 %v1023
    %v1249 = vpop.f32.mrf.mxu0
    %v1250 = vadd.f32 %v1059, %v1249
    %v1251 = vpop.f32.mrf.mxu0
    %v1252 = vadd.f32 %v1059, %v1251
    %1253 = vdwg.mxu0
    %1254 = vmatpush.bf16.msra.mxu0 %v1192
    %1255 = vmatpush.bf16.msra.mxu0 %v1188
    %1256 = vmatpush.bf16.msra.mxu0 %v1184
    %1257 = vmatpush.bf16.msra.mxu0 %v1180
    %1258 = vmatpush.bf16.msra.mxu0 %v1176
    %1259 = vmatpush.bf16.msra.mxu0 %v1172
    %1260 = vmatpush.bf16.msra.mxu0 %v1168
    %1261 = vmatpush.bf16.msra.mxu0 %v1164
    %1262 = vmatmul.bf16.gmra.mxu0 %v1023
    %v1263 = vpop.f32.mrf.mxu0
    %v1264 = vadd.f32 %v1060, %v1263
    %v1265 = vpop.f32.mrf.mxu0
    %v1266 = vadd.f32 %v1060, %v1265
    %1267 = vdwg.mxu0
    %1268 = vmatpush.bf16.msra.mxu0 %v1193
    %1269 = vmatpush.bf16.msra.mxu0 %v1189
    %1270 = vmatpush.bf16.msra.mxu0 %v1185
    %1271 = vmatpush.bf16.msra.mxu0 %v1181
    %1272 = vmatpush.bf16.msra.mxu0 %v1177
    %1273 = vmatpush.bf16.msra.mxu0 %v1173
    %1274 = vmatpush.bf16.msra.mxu0 %v1169
    %1275 = vmatpush.bf16.msra.mxu0 %v1165
    %1276 = vmatmul.bf16.gmra.mxu0 %v1023
    %v1277 = vpop.f32.mrf.mxu0
    %v1278 = vadd.f32 %v1061, %v1277
    %v1279 = vpop.f32.mrf.mxu0
    %v1280 = vadd.f32 %v1061, %v1279
    %1281 = vdwg.mxu0
    %v1282 = vmax.f32 %v1236, 0.0
    %v1283 = vmax.f32 %v1250, 0.0
    %v1284 = vmax.f32 %v1264, 0.0
    %v1285 = vmax.f32 %v1278, 0.0
    %v1286 = vmax.f32 %v1238, 0.0
    %v1287 = vmax.f32 %v1252, 0.0
    %v1288 = vmax.f32 %v1266, 0.0
    %v1289 = vmax.f32 %v1280, 0.0
    %v1290 = vpack.c.bf16 %v1286, %v1282
    %v1291 = vpack.c.bf16 %v1287, %v1283
    %v1292 = vpack.c.bf16 %v1288, %v1284
    %v1293 = vpack.c.bf16 %v1289, %v1285
    %v1294 = vld [vmem:[#allocation10] sm:$0xf]
    %v1295 = vld [vmem:[#allocation10 + $0x4] sm:$0xf]
    %v1296 = vld [vmem:[#allocation10 + $0x8] sm:$0xf]
    %v1297 = vld [vmem:[#allocation10 + $0xc] sm:$0xf]
    %v1298 = vld [vmem:[#allocation10 + $0x10] sm:$0xf]
    %v1299 = vld [vmem:[#allocation10 + $0x14] sm:$0xf]
    %v1300 = vld [vmem:[#allocation10 + $0x18] sm:$0xf]
    %v1301 = vld [vmem:[#allocation10 + $0x1c] sm:$0xf]
    %v1302 = vld [vmem:[#allocation10 + $0x20] sm:$0xf]
    %v1303 = vld [vmem:[#allocation10 + $0x24] sm:$0xf]
    %v1304 = vld [vmem:[#allocation10 + $0x28] sm:$0xf]
    %v1305 = vld [vmem:[#allocation10 + $0x2c] sm:$0xf]
    %v1306 = vld [vmem:[#allocation10 + $0x30] sm:$0xf]
    %v1307 = vld [vmem:[#allocation10 + $0x34] sm:$0xf]
    %v1308 = vld [vmem:[#allocation10 + $0x38] sm:$0xf]
    %v1309 = vld [vmem:[#allocation10 + $0x3c] sm:$0xf]
    %v1310 = vld [vmem:[#allocation10 + $0x40] sm:$0xf]
    %v1311 = vld [vmem:[#allocation10 + $0x44] sm:$0xf]
    %v1312 = vld [vmem:[#allocation10 + $0x48] sm:$0xf]
    %v1313 = vld [vmem:[#allocation10 + $0x4c] sm:$0xf]
    %v1314 = vld [vmem:[#allocation10 + $0x50] sm:$0xf]
    %v1315 = vld [vmem:[#allocation10 + $0x54] sm:$0xf]
    %v1316 = vld [vmem:[#allocation10 + $0x58] sm:$0xf]
    %v1317 = vld [vmem:[#allocation10 + $0x5c] sm:$0xf]
    %v1318 = vld [vmem:[#allocation10 + $0x60] sm:$0xf]
    %v1319 = vld [vmem:[#allocation10 + $0x64] sm:$0xf]
    %v1320 = vld [vmem:[#allocation10 + $0x68] sm:$0xf]
    %v1321 = vld [vmem:[#allocation10 + $0x6c] sm:$0xf]
    %v1322 = vld [vmem:[#allocation10 + $0x70] sm:$0xf]
    %v1323 = vld [vmem:[#allocation10 + $0x74] sm:$0xf]
    %v1324 = vld [vmem:[#allocation10 + $0x78] sm:$0xf]
    %v1325 = vld [vmem:[#allocation10 + $0x7c] sm:$0xf]
    %v1326 = vld [vmem:[#allocation10 + $0x80] sm:$0xf]
    %v1327 = vld [vmem:[#allocation10 + $0x84] sm:$0xf]
    %v1328 = vld [vmem:[#allocation10 + $0x88] sm:$0xf]
    %v1329 = vld [vmem:[#allocation10 + $0x8c] sm:$0xf]
    %v1330 = vld [vmem:[#allocation10 + $0x90] sm:$0xf]
    %v1331 = vld [vmem:[#allocation10 + $0x94] sm:$0xf]
    %v1332 = vld [vmem:[#allocation10 + $0x98] sm:$0xf]
    %v1333 = vld [vmem:[#allocation10 + $0x9c] sm:$0xf]
    %v1334 = vld [vmem:[#allocation10 + $0xa0] sm:$0xf]
    %v1335 = vld [vmem:[#allocation10 + $0xa4] sm:$0xf]
    %v1336 = vld [vmem:[#allocation10 + $0xa8] sm:$0xf]
    %v1337 = vld [vmem:[#allocation10 + $0xac] sm:$0xf]
    %v1338 = vld [vmem:[#allocation10 + $0xb0] sm:$0xf]
    %v1339 = vld [vmem:[#allocation10 + $0xb4] sm:$0xf]
    %v1340 = vld [vmem:[#allocation10 + $0xb8] sm:$0xf]
    %v1341 = vld [vmem:[#allocation10 + $0xbc] sm:$0xf]
    %v1342 = vld [vmem:[#allocation10 + $0xc0] sm:$0xf]
    %v1343 = vld [vmem:[#allocation10 + $0xc4] sm:$0xf]
    %v1344 = vld [vmem:[#allocation10 + $0xc8] sm:$0xf]
    %v1345 = vld [vmem:[#allocation10 + $0xcc] sm:$0xf]
    %v1346 = vld [vmem:[#allocation10 + $0xd0] sm:$0xf]
    %v1347 = vld [vmem:[#allocation10 + $0xd4] sm:$0xf]
    %v1348 = vld [vmem:[#allocation10 + $0xd8] sm:$0xf]
    %v1349 = vld [vmem:[#allocation10 + $0xdc] sm:$0xf]
    %v1350 = vld [vmem:[#allocation10 + $0xe0] sm:$0xf]
    %v1351 = vld [vmem:[#allocation10 + $0xe4] sm:$0xf]
    %v1352 = vld [vmem:[#allocation10 + $0xe8] sm:$0xf]
    %v1353 = vld [vmem:[#allocation10 + $0xec] sm:$0xf]
    %v1354 = vld [vmem:[#allocation10 + $0xf0] sm:$0xf]
    %v1355 = vld [vmem:[#allocation10 + $0xf4] sm:$0xf]
    %v1356 = vld [vmem:[#allocation10 + $0xf8] sm:$0xf]
    %v1357 = vld [vmem:[#allocation10 + $0xfc] sm:$0xf]
    %v1358 = vld [vmem:[%s14] sm:$0x1]
    %v1360 = vperm.slane %v1358, 0
    %v1426 = vunpack.c.l.b16 %v1294
    %v1427 = vunpack.c.l.b16 %v1295
    %v1428 = vunpack.c.l.b16 %v1296
    %v1429 = vunpack.c.l.b16 %v1297
    %v1430 = vunpack.c.l.b16 %v1298
    %v1431 = vunpack.c.l.b16 %v1299
    %v1432 = vunpack.c.l.b16 %v1300
    %v1433 = vunpack.c.l.b16 %v1301
    %v1434 = vunpack.c.l.b16 %v1302
    %v1435 = vunpack.c.l.b16 %v1303
    %v1436 = vunpack.c.l.b16 %v1304
    %v1437 = vunpack.c.l.b16 %v1305
    %v1438 = vunpack.c.l.b16 %v1306
    %v1439 = vunpack.c.l.b16 %v1307
    %v1440 = vunpack.c.l.b16 %v1308
    %v1441 = vunpack.c.l.b16 %v1309
    %v1442 = vunpack.c.l.b16 %v1310
    %v1443 = vunpack.c.l.b16 %v1311
    %v1444 = vunpack.c.l.b16 %v1312
    %v1445 = vunpack.c.l.b16 %v1313
    %v1446 = vunpack.c.l.b16 %v1314
    %v1447 = vunpack.c.l.b16 %v1315
    %v1448 = vunpack.c.l.b16 %v1316
    %v1449 = vunpack.c.l.b16 %v1317
    %v1450 = vunpack.c.l.b16 %v1318
    %v1451 = vunpack.c.l.b16 %v1319
    %v1452 = vunpack.c.l.b16 %v1320
    %v1453 = vunpack.c.l.b16 %v1321
    %v1454 = vunpack.c.l.b16 %v1322
    %v1455 = vunpack.c.l.b16 %v1323
    %v1456 = vunpack.c.l.b16 %v1324
    %v1457 = vunpack.c.l.b16 %v1325
    %v1458 = vunpack.c.l.b16 %v1326
    %v1459 = vunpack.c.l.b16 %v1327
    %v1460 = vunpack.c.l.b16 %v1328
    %v1461 = vunpack.c.l.b16 %v1329
    %v1462 = vunpack.c.l.b16 %v1330
    %v1463 = vunpack.c.l.b16 %v1331
    %v1464 = vunpack.c.l.b16 %v1332
    %v1465 = vunpack.c.l.b16 %v1333
    %v1466 = vunpack.c.l.b16 %v1334
    %v1467 = vunpack.c.l.b16 %v1335
    %v1468 = vunpack.c.l.b16 %v1336
    %v1469 = vunpack.c.l.b16 %v1337
    %v1470 = vunpack.c.l.b16 %v1338
    %v1471 = vunpack.c.l.b16 %v1339
    %v1472 = vunpack.c.l.b16 %v1340
    %v1473 = vunpack.c.l.b16 %v1341
    %v1474 = vunpack.c.l.b16 %v1342
    %v1475 = vunpack.c.l.b16 %v1343
    %v1476 = vunpack.c.l.b16 %v1344
    %v1477 = vunpack.c.l.b16 %v1345
    %v1478 = vunpack.c.l.b16 %v1346
    %v1479 = vunpack.c.l.b16 %v1347
    %v1480 = vunpack.c.l.b16 %v1348
    %v1481 = vunpack.c.l.b16 %v1349
    %v1482 = vunpack.c.l.b16 %v1350
    %v1483 = vunpack.c.l.b16 %v1351
    %v1484 = vunpack.c.l.b16 %v1352
    %v1485 = vunpack.c.l.b16 %v1353
    %v1486 = vunpack.c.l.b16 %v1354
    %v1487 = vunpack.c.l.b16 %v1355
    %v1488 = vunpack.c.l.b16 %v1356
    %v1489 = vunpack.c.l.b16 %v1357
    %v1490 = vpack.c.b16 %v1427, %v1426
    %v1491 = vpack.c.b16 %v1429, %v1428
    %v1492 = vpack.c.b16 %v1431, %v1430
    %v1493 = vpack.c.b16 %v1433, %v1432
    %v1494 = vpack.c.b16 %v1435, %v1434
    %v1495 = vpack.c.b16 %v1437, %v1436
    %v1496 = vpack.c.b16 %v1439, %v1438
    %v1497 = vpack.c.b16 %v1441, %v1440
    %v1498 = vpack.c.b16 %v1443, %v1442
    %v1499 = vpack.c.b16 %v1445, %v1444
    %v1500 = vpack.c.b16 %v1447, %v1446
    %v1501 = vpack.c.b16 %v1449, %v1448
    %v1502 = vpack.c.b16 %v1451, %v1450
    %v1503 = vpack.c.b16 %v1453, %v1452
    %v1504 = vpack.c.b16 %v1455, %v1454
    %v1505 = vpack.c.b16 %v1457, %v1456
    %v1506 = vpack.c.b16 %v1459, %v1458
    %v1507 = vpack.c.b16 %v1461, %v1460
    %v1508 = vpack.c.b16 %v1463, %v1462
    %v1509 = vpack.c.b16 %v1465, %v1464
    %v1510 = vpack.c.b16 %v1467, %v1466
    %v1511 = vpack.c.b16 %v1469, %v1468
    %v1512 = vpack.c.b16 %v1471, %v1470
    %v1513 = vpack.c.b16 %v1473, %v1472
    %v1514 = vpack.c.b16 %v1475, %v1474
    %v1515 = vpack.c.b16 %v1477, %v1476
    %v1516 = vpack.c.b16 %v1479, %v1478
    %v1517 = vpack.c.b16 %v1481, %v1480
    %v1518 = vpack.c.b16 %v1483, %v1482
    %v1519 = vpack.c.b16 %v1485, %v1484
    %v1520 = vpack.c.b16 %v1487, %v1486
    %v1521 = vpack.c.b16 %v1489, %v1488
    %1554 = vmatpush.bf16.msra.mxu0 %v1497
    %1555 = vmatpush.bf16.msra.mxu0 %v1496
    %1556 = vmatpush.bf16.msra.mxu0 %v1495
    %1557 = vmatpush.bf16.msra.mxu0 %v1494
    %1558 = vmatpush.bf16.msra.mxu0 %v1493
    %1559 = vmatpush.bf16.msra.mxu0 %v1492
    %1560 = vmatpush.bf16.msra.mxu0 %v1491
    %1561 = vmatpush.bf16.msra.mxu0 %v1490
    %1562 = vmatmul.bf16.gmra.mxu0 %v1290
    %v1563 = vpop.f32.mrf.mxu0
    %v1564 = vadd.f32 %v1360, %v1563
    %v1565 = vpop.f32.mrf.mxu0
    %v1566 = vadd.f32 %v1360, %v1565
    %1567 = vdwg.mxu0
    %1568 = vmatpush.bf16.msra.mxu0 %v1505
    %1569 = vmatpush.bf16.msra.mxu0 %v1504
    %1570 = vmatpush.bf16.msra.mxu0 %v1503
    %1571 = vmatpush.bf16.msra.mxu0 %v1502
    %1572 = vmatpush.bf16.msra.mxu0 %v1501
    %1573 = vmatpush.bf16.msra.mxu0 %v1500
    %1574 = vmatpush.bf16.msra.mxu0 %v1499
    %1575 = vmatpush.bf16.msra.mxu0 %v1498
    %1576 = vmatmul.bf16.gmra.mxu0 %v1291
    %v1577 = vpop.f32.mrf.mxu0
    %v1578 = vadd.f32 %v1564, %v1577
    %v1579 = vpop.f32.mrf.mxu0
    %v1580 = vadd.f32 %v1566, %v1579
    %1581 = vdwg.mxu0
    %1582 = vmatpush.bf16.msra.mxu0 %v1513
    %1583 = vmatpush.bf16.msra.mxu0 %v1512
    %1584 = vmatpush.bf16.msra.mxu0 %v1511
    %1585 = vmatpush.bf16.msra.mxu0 %v1510
    %1586 = vmatpush.bf16.msra.mxu0 %v1509
    %1587 = vmatpush.bf16.msra.mxu0 %v1508
    %1588 = vmatpush.bf16.msra.mxu0 %v1507
    %1589 = vmatpush.bf16.msra.mxu0 %v1506
    %1590 = vmatmul.bf16.gmra.mxu0 %v1292
    %v1591 = vpop.f32.mrf.mxu0
    %v1592 = vadd.f32 %v1578, %v1591
    %v1593 = vpop.f32.mrf.mxu0
    %v1594 = vadd.f32 %v1580, %v1593
    %1595 = vdwg.mxu0
    %1596 = vmatpush.bf16.msra.mxu0 %v1521
    %1597 = vmatpush.bf16.msra.mxu0 %v1520
    %1598 = vmatpush.bf16.msra.mxu0 %v1519
    %1599 = vmatpush.bf16.msra.mxu0 %v1518
    %1600 = vmatpush.bf16.msra.mxu0 %v1517
    %1601 = vmatpush.bf16.msra.mxu0 %v1516
    %1602 = vmatpush.bf16.msra.mxu0 %v1515
    %1603 = vmatpush.bf16.msra.mxu0 %v1514
    %1604 = vmatmul.bf16.gmra.mxu0 %v1293
    %v1605 = vpop.f32.mrf.mxu0
    %v1606 = vadd.f32 %v1592, %v1605
    %v1607 = vpop.f32.mrf.mxu0
    %v1608 = vadd.f32 %v1594, %v1607
    %1609 = vdwg.mxu0
    %v1610 = vadd.f32 %v969, %v1606
    %v1611 = vadd.f32 %v970, %v1608
    %v1612 = vmax.f32 %v1610, 0.0
    %v1613 = vmax.f32 %v1611, 0.0
    %v1614 = vpack.c.bf16 %v1613, %v1612
    %v1615 = vld [vmem:[#allocation11] sm:$0xf]
    %v1616 = vld [vmem:[#allocation11 + $0x4] sm:$0xf]
    %v1617 = vld [vmem:[#allocation11 + $0x8] sm:$0xf]
    %v1618 = vld [vmem:[#allocation11 + $0xc] sm:$0xf]
    %v1619 = vld [vmem:[#allocation11 + $0x10] sm:$0xf]
    %v1620 = vld [vmem:[#allocation11 + $0x14] sm:$0xf]
    %v1621 = vld [vmem:[#allocation11 + $0x18] sm:$0xf]
    %v1622 = vld [vmem:[#allocation11 + $0x1c] sm:$0xf]
    %v1623 = vld [vmem:[#allocation11 + $0x20] sm:$0xf]
    %v1624 = vld [vmem:[#allocation11 + $0x24] sm:$0xf]
    %v1625 = vld [vmem:[#allocation11 + $0x28] sm:$0xf]
    %v1626 = vld [vmem:[#allocation11 + $0x2c] sm:$0xf]
    %v1627 = vld [vmem:[#allocation11 + $0x30] sm:$0xf]
    %v1628 = vld [vmem:[#allocation11 + $0x34] sm:$0xf]
    %v1629 = vld [vmem:[#allocation11 + $0x38] sm:$0xf]
    %v1630 = vld [vmem:[#allocation11 + $0x3c] sm:$0xf]
    %v1631 = vld [vmem:[%s16] sm:$0x1]
    %v1633 = vperm.slane %v1631, 0
    %v1651 = vunpack.c.l.b16 %v1615
    %v1652 = vunpack.c.l.b16 %v1616
    %v1653 = vunpack.c.l.b16 %v1617
    %v1654 = vunpack.c.l.b16 %v1618
    %v1655 = vunpack.c.l.b16 %v1619
    %v1656 = vunpack.c.l.b16 %v1620
    %v1657 = vunpack.c.l.b16 %v1621
    %v1658 = vunpack.c.l.b16 %v1622
    %v1659 = vunpack.c.l.b16 %v1623
    %v1660 = vunpack.c.l.b16 %v1624
    %v1661 = vunpack.c.l.b16 %v1625
    %v1662 = vunpack.c.l.b16 %v1626
    %v1663 = vunpack.c.l.b16 %v1627
    %v1664 = vunpack.c.l.b16 %v1628
    %v1665 = vunpack.c.l.b16 %v1629
    %v1666 = vunpack.c.l.b16 %v1630
    %v1667 = vpack.c.b16 %v1652, %v1651
    %v1668 = vpack.c.b16 %v1654, %v1653
    %v1669 = vpack.c.b16 %v1656, %v1655
    %v1670 = vpack.c.b16 %v1658, %v1657
    %v1671 = vpack.c.b16 %v1660, %v1659
    %v1672 = vpack.c.b16 %v1662, %v1661
    %v1673 = vpack.c.b16 %v1664, %v1663
    %v1674 = vpack.c.b16 %v1666, %v1665
    %1683 = vmatpush.bf16.msra.mxu0 %v1674
    %1684 = vmatpush.bf16.msra.mxu0 %v1673
    %1685 = vmatpush.bf16.msra.mxu0 %v1672
    %1686 = vmatpush.bf16.msra.mxu0 %v1671
    %1687 = vmatpush.bf16.msra.mxu0 %v1670
    %1688 = vmatpush.bf16.msra.mxu0 %v1669
    %1689 = vmatpush.bf16.msra.mxu0 %v1668
    %1690 = vmatpush.bf16.msra.mxu0 %v1667
    %1691 = vmatmul.bf16.gmra.mxu0 %v1614
    %v1692 = vpop.f32.mrf.mxu0
    %v1693 = vadd.f32 %v1633, %v1692
    %v1694 = vpop.f32.mrf.mxu0
    %v1695 = vadd.f32 %v1633, %v1694
    %1696 = vdwg.mxu0
    %1697 = vst [vmem:[#allocation13] sm:$0xff] %v1693
    %1698 = vst [vmem:[#allocation13 + $0x8] sm:$0xff] %v1695
    // Predicated region
    $region94: #{mlp_resnet_forward.1} parent=1 // pred_check
      _
    $region95: #{mlp_resnet_forward.1} parent=1 // pred_check_branch
      %1700 = sbr.rel (0) target = $region97
    $region96: #{mlp_resnet_forward.1} parent=1 // pred_region
      %1702 = vsyncadd [#allocation4], 0
      %s1703 = sshll.u32 [#allocation13], 4
      %s1704 = int_to_ptr.vmem [resolvable:$true] %s1703
      %s1705 = sshll.u32 %s17, 4
      %s1706 = int_to_ptr.hbm [resolvable:$true] %s1705
      %1711 = dma.vmem_to_hbm [thread:$0]  %s1704, 256, %s1706, [#allocation4], 128, 128, 8
    $region97: #{mlp_resnet_forward.1} parent=1 // pred_fallthru
      _
    // Predicated region
    $region98: #{mlp_resnet_forward.1} parent=1 // pred_check
      _
    $region99: #{mlp_resnet_forward.1} parent=1 // pred_check_branch
      %1713 = sbr.rel (0) target = $region101
    $region100: #{mlp_resnet_forward.1} parent=1 // pred_region
      %1715 = dma.done [#allocation4], 256
    $region101: #{mlp_resnet_forward.1} parent=1 // pred_fallthru
      _
    %1716 = vsyncpa [#allocation3], 1
    %1717 = vsyncpa [#allocation6], 1
    %1718 = vsyncpa [#allocation9], 1
    %1719 = vsyncpa [#allocation12], 1
    %1720 = vsyncpa [#allocation4], 1

</llo_original>
